<compile_context>
chip_gen: v7x
topology: tpu7x:2x2x1
jax: 0.10.0
libtpu: 0.0.40
codegen_flags: <defaults>
</compile_context>

<pallas_src>
import functools

import jax
import jax.numpy as jnp
from jax import lax
from jax.experimental import pallas as pl
from jax.experimental.pallas import tpu as pltpu

LEAKY_SLOPE = 0.01   # nn.LeakyReLU default negative_slope
EPS = 1e-12          # F.normalize default eps


def _epilogue(ego, side, w1_ref, b1_ref, w2_ref, b2_ref, o_ref):
    """Bi-interaction linears + LeakyReLU + L2 row-normalize for one row block."""
    ego = ego.astype(jnp.float32)
    h1 = jnp.dot(ego + side, w1_ref[...], preferred_element_type=jnp.float32) + b1_ref[...]
    h2 = jnp.dot(ego * side, w2_ref[...], preferred_element_type=jnp.float32) + b2_ref[...]
    act1 = jnp.where(h1 > 0, h1, LEAKY_SLOPE * h1)
    act2 = jnp.where(h2 > 0, h2, LEAKY_SLOPE * h2)
    agg = act1 + act2
    # message_dropout: identity in eval mode.
    # TODO(synk): training-mode dropout (pltpu.prng_random_bits mask) not implemented.
    # F.normalize(agg, p=2, dim=1) == agg / max(||agg||, eps); rsqrt is one EUP push.
    sumsq = jnp.maximum(jnp.sum(agg * agg, axis=1, keepdims=True), EPS * EPS)
    o_ref[...] = (agg * lax.rsqrt(sumsq)).astype(o_ref.dtype)


def _kernel_resident(a_ref, ego_ref, w1_ref, b1_ref, w2_ref, b2_ref, o_ref,
                     side_acc, *, tm, tk, bf16_matmul):
    """Grid = (row blocks i, contraction blocks k); ego fully VMEM-resident.

    a_ref:    (tm, tk)    tile of the attentive matrix (streamed over i, k)
    ego_ref:  (N, Din)    whole ego embedding table, resident in VMEM (single copy)
    w1/w2:    (Din, Dout) linear weights (x @ W layout), resident in VMEM
    b1/b2:    (1, Dout)   biases, resident in VMEM
    o_ref:    (tm, Dout)  output row block (resident across k)
    side_acc: (tm, Din)   f32 VMEM accumulator for side = A @ ego
    """
    i = pl.program_id(0)
    k = pl.program_id(1)

    @pl.when(k == 0)
    def _():
        side_acc[...] = jnp.zeros_like(side_acc)

    koff = pl.multiple_of(k * tk, tk)
    a_tile = a_ref[...]
    ego_k = ego_ref[pl.ds(koff, tk), :]
    if bf16_matmul:
        # v5e path: bf16 operands, f32 accumulation (f32 MXU is multi-pass emulation).
        a_tile = a_tile.astype(jnp.bfloat16)
        ego_k = ego_k.astype(jnp.bfloat16)
    side_acc[...] += jnp.dot(a_tile, ego_k, preferred_element_type=jnp.float32)

    @pl.when(k == pl.num_programs(1) - 1)
    def _():
        roff = pl.multiple_of(i * tm, tm)
        ego_rows = ego_ref[pl.ds(roff, tm), :]
        _epilogue(ego_rows, side_acc[...], w1_ref, b1_ref, w2_ref, b2_ref, o_ref)


def _kernel_stream(a_ref, ego_k_ref, ego_row_ref, w1_ref, b1_ref, w2_ref, b2_ref,
                   o_ref, side_acc, *, bf16_matmul):
    """Streaming fallback when ego is too large to keep resident in VMEM."""
    k = pl.program_id(1)

    @pl.when(k == 0)
    def _():
        side_acc[...] = jnp.zeros_like(side_acc)

    a_tile = a_ref[...]
    ego_k = ego_k_ref[...]
    if bf16_matmul:
        a_tile = a_tile.astype(jnp.bfloat16)
        ego_k = ego_k.astype(jnp.bfloat16)
    side_acc[...] += jnp.dot(a_tile, ego_k, preferred_element_type=jnp.float32)

    @pl.when(k == pl.num_programs(1) - 1)
    def _():
        _epilogue(ego_row_ref[...], side_acc[...], w1_ref, b1_ref, w2_ref, b2_ref, o_ref)


def _pick_tile(n, desired, granule):
    """Largest multiple of `granule` <= desired that divides n, else n (full dim)."""
    t = min(desired, n)
    t -= t % granule
    while t >= granule:
        if n % t == 0:
            return t
        t -= granule
    return n


def _pick_row_tile(n, desired):
    t = _pick_tile(n, desired, 8)
    # Keep at least two row blocks so the "parallel" axis can be split across the
    # two TensorCores of a v7x chip (megacore); harmless elsewhere.
    if t == n and n >= 16 and (n // 2) % 8 == 0:
        t = n // 2
    return t


def _vmem_capacity_bytes():
    try:
        return int(pltpu.get_tpu_info().vmem_capacity_bytes)
    except Exception:
        return 64 * 1024 * 1024   # conservative: v7x per-TensorCore VMEM


def _default_bf16_matmul():
    # v5e: f32 MXU matmuls are multi-pass bf16 emulation -> side matmul is
    # compute-bound; bf16 operands return it to HBM-bound.  v6e/v7x: already
    # HBM-bound, keep exact f32 operands.
    try:
        kind = jax.devices()[0].device_kind.lower()
        return ("v5e" in kind) or ("v5 lite" in kind) or ("v5litepod" in kind)
    except Exception:
        return False


@functools.partial(jax.jit,
                   static_argnames=("tm", "tk", "bf16_matmul", "ego_resident"))
def aggregator_forward(attentive_matrix, ego, w1, b1, w2, b2, *,
                       tm=None, tk=None, bf16_matmul=None, ego_resident=None):
    N, Din = ego.shape
    Dout = w1.shape[1]
    assert attentive_matrix.shape == (N, N)
    assert w1.shape == (Din, Dout) and w2.shape == (Din, Dout)

    if tm is None:
        tm = _pick_row_tile(N, 512)
    if tk is None:
        tk = _pick_tile(N, 1024, 128)
    assert N % tm == 0, "row tile tm must divide N"
    assert N % tk == 0, "contraction tile tk must divide N"

    if bf16_matmul is None:
        bf16_matmul = _default_bf16_matmul()

    vmem_cap = _vmem_capacity_bytes()
    usable = int(vmem_cap * 0.85)

    ego_bytes = N * Din * ego.dtype.itemsize
    if ego_resident is None:
        # Resident ego must leave room for the A-tile double buffer + output + scratch.
        ego_resident = ego_bytes <= min(12 * 1024 * 1024, usable // 4)

    b1 = b1.reshape(1, Dout)
    b2 = b2.reshape(1, Dout)

    grid = (N // tm, N // tk)
    a_isz = attentive_matrix.dtype.itemsize
    e_isz = ego.dtype.itemsize
    w_bytes = 2 * Din * Dout * w1.dtype.itemsize + 2 * Dout * b1.dtype.itemsize

    if ego_resident:
        kernel = functools.partial(_kernel_resident, tm=tm, tk=tk,
                                   bf16_matmul=bf16_matmul)
        in_specs = [
            pl.BlockSpec((tm, tk), lambda i, k: (i, k)),          # A tile (streamed)
            pl.BlockSpec(memory_space=pltpu.MemorySpace.VMEM),    # ego (resident, 1 copy)
            pl.BlockSpec(memory_space=pltpu.MemorySpace.VMEM),    # W1
            pl.BlockSpec(memory_space=pltpu.MemorySpace.VMEM),    # b1
            pl.BlockSpec(memory_space=pltpu.MemorySpace.VMEM),    # W2
            pl.BlockSpec(memory_space=pltpu.MemorySpace.VMEM),    # b2
        ]
        args = (attentive_matrix, ego, w1, b1, w2, b2)
        vmem_need = (2 * tm * tk * a_isz          # A-tile double buffer
                     + ego_bytes                  # resident ego (single copy)
                     + w_bytes
                     + 2 * tm * Dout * e_isz      # output double buffer
                     + 4 * tm * Din)              # f32 side accumulator
        hbm_bytes = a_isz * N * N + ego_bytes + w_bytes + e_isz * N * Dout
    else:
        kernel = functools.partial(_kernel_stream, bf16_matmul=bf16_matmul)
        in_specs = [
            pl.BlockSpec((tm, tk), lambda i, k: (i, k)),          # A tile (streamed)
            pl.BlockSpec((tk, Din), lambda i, k: (k, 0)),         # ego K-slab (streamed)
            pl.BlockSpec((tm, Din), lambda i, k: (i, 0)),         # ego row block
            pl.BlockSpec(memory_space=pltpu.MemorySpace.VMEM),    # W1
            pl.BlockSpec(memory_space=pltpu.MemorySpace.VMEM),    # b1
            pl.BlockSpec(memory_space=pltpu.MemorySpace.VMEM),    # W2
            pl.BlockSpec(memory_space=pltpu.MemorySpace.VMEM),    # b2
        ]
        args = (attentive_matrix, ego, ego, w1, b1, w2, b2)
        vmem_need = (2 * tm * tk * a_isz
                     + 2 * tk * Din * e_isz
                     + 2 * tm * Din * e_isz
                     + w_bytes
                     + 2 * tm * Dout * e_isz
                     + 4 * tm * Din)
        hbm_bytes = (a_isz * N * N + (N // tm) * N * Din * e_isz + N * Din * e_isz
                     + w_bytes + e_isz * N * Dout)

    vmem_limit = int(min(max(2 * vmem_need, 32 * 1024 * 1024), usable))

    cost = pl.CostEstimate(
        flops=2 * N * N * Din + 4 * N * Din * Dout + 8 * N * Dout,
        transcendentals=N,
        bytes_accessed=int(hbm_bytes),
    )

    return pl.pallas_call(
        kernel,
        out_shape=jax.ShapeDtypeStruct((N, Dout), ego.dtype),
        grid_spec=pltpu.PrefetchScalarGridSpec(
            num_scalar_prefetch=0,
            grid=grid,
            in_specs=in_specs,
            out_specs=pl.BlockSpec((tm, Dout), lambda i, k: (i, 0)),
            scratch_shapes=[pltpu.VMEM((tm, Din), jnp.float32)],
        ),
        compiler_params=pltpu.CompilerParams(
            dimension_semantics=("parallel", "arbitrary"),
            vmem_limit_bytes=vmem_limit,
        ),
        cost_estimate=cost,
    )(*args)


def reference_forward(attentive_matrix, ego, w1, b1, w2, b2):
    side = attentive_matrix @ ego
    h1 = (ego + side) @ w1 + b1
    h2 = (ego * side) @ w2 + b2
    leaky = lambda x: jnp.where(x > 0, x, LEAKY_SLOPE * x)
    agg = leaky(h1) + leaky(h2)
    norm = jnp.maximum(jnp.sqrt(jnp.sum(agg * agg, axis=1, keepdims=True)), EPS)
    return agg / norm


def xavier_uniform(key, fan_in, fan_out, dtype=jnp.float32):
    bound = (6.0 / (fan_in + fan_out)) ** 0.5
    return jax.random.uniform(key, (fan_in, fan_out), dtype, -bound, bound)


if __name__ == "__main__":
    # Small but tile-aligned shapes: N entities = 512, input_dim = output_dim = 128.
    N, Din, Dout = 512, 128, 128

    key = jax.random.PRNGKey(0)
    k_ego, k_att, k_w1, k_b1, k_w2, k_b2 = jax.random.split(key, 6)

    ego = jax.random.normal(k_ego, (N, Din), jnp.float32)
    # row-stochastic attentive matrix (sparse-attention surrogate)
    att = jax.nn.softmax(jax.random.normal(k_att, (N, N), jnp.float32), axis=-1)

    # parameter init matching nn.Linear shapes (stored transposed: (in, out))
    w1 = xavier_uniform(k_w1, Din, Dout)
    w2 = xavier_uniform(k_w2, Din, Dout)
    lin_bound = 1.0 / (Din ** 0.5)
    b1 = jax.random.uniform(k_b1, (Dout,), jnp.float32, -lin_bound, lin_bound)
    b2 = jax.random.uniform(k_b2, (Dout,), jnp.float32, -lin_bound, lin_bound)

    ref = reference_forward(att, ego, w1, b1, w2, b2)

    # Default (VMEM-resident ego) path, exact f32 MXU operands.
    out = aggregator_forward(att, ego, w1, b1, w2, b2, bf16_matmul=False)
    out = jax.block_until_ready(out)
    assert out.shape == (N, Dout)
    assert jnp.allclose(out, ref, atol=1e-4, rtol=1e-4), "resident-path mismatch vs reference"

    # Streaming fallback path (large-N code path), exact f32 MXU operands.
    out_s = aggregator_forward(att, ego, w1, b1, w2, b2, bf16_matmul=False,
                               ego_resident=False)
    out_s = jax.block_until_ready(out_s)
    assert jnp.allclose(out_s, ref, atol=1e-4, rtol=1e-4), "streaming-path mismatch vs reference"

    # In-kernel bf16 operand cast for the side matmul (v5e perf path): looser tolerance.
    out_bf16 = aggregator_forward(att, ego, w1, b1, w2, b2, bf16_matmul=True)
    out_bf16 = jax.block_until_ready(out_bf16)
    assert jnp.allclose(out_bf16, ref, atol=5e-2, rtol=5e-2), "bf16-operand path mismatch"

    print("KERNEL_OK")
</pallas_src>

<mosaic_0001>
module attributes {stable_mosaic.version = 11 : i64} {
  func.func @_kernel_resident(%arg0: i32, %arg1: i32, %arg2: memref<256x512xf32, #tpu.memory_space<vmem>>, %arg3: memref<512x128xf32, #tpu.memory_space<vmem>>, %arg4: memref<128x128xf32, #tpu.memory_space<vmem>>, %arg5: memref<1x128xf32, #tpu.memory_space<vmem>>, %arg6: memref<128x128xf32, #tpu.memory_space<vmem>>, %arg7: memref<1x128xf32, #tpu.memory_space<vmem>>, %arg8: memref<256x128xf32, #tpu.memory_space<vmem>>, %arg9: memref<256x128xf32, #tpu.memory_space<vmem>>) attributes {dimension_semantics = [#tpu.dimension_semantics<parallel>, #tpu.dimension_semantics<arbitrary>], iteration_bounds = array<i64: 2, 1>, scalar_prefetch = 0 : i64, scratch_operands = 1 : i64, tpu.core_type = #tpu.core_type<tc>, window_params = [{transform_indices = @transform_0, window_bounds = array<i64: 256, 512>}, {pipeline_mode = #tpu.pipeline_mode<synchronous>, transform_indices = @transform_1, window_bounds = array<i64: 512, 128>}, {pipeline_mode = #tpu.pipeline_mode<synchronous>, transform_indices = @transform_2, window_bounds = array<i64: 128, 128>}, {pipeline_mode = #tpu.pipeline_mode<synchronous>, transform_indices = @transform_3, window_bounds = array<i64: 1, 128>}, {pipeline_mode = #tpu.pipeline_mode<synchronous>, transform_indices = @transform_4, window_bounds = array<i64: 128, 128>}, {pipeline_mode = #tpu.pipeline_mode<synchronous>, transform_indices = @transform_5, window_bounds = array<i64: 1, 128>}, {transform_indices = @transform_6, window_bounds = array<i64: 256, 128>}]} {
    %c0_i32 = arith.constant 0 : i32
    %0 = arith.cmpi eq, %arg1, %c0_i32 : i32
    %1 = arith.extui %0 : i1 to i32
    %c0_i32_0 = arith.constant 0 : i32
    %2 = arith.cmpi ne, %1, %c0_i32_0 : i32
    scf.if %2 {
      %cst_9 = arith.constant 0.000000e+00 : f32
      %15 = vector.broadcast %cst_9 : f32 to vector<256x128xf32>
      %c0_10 = arith.constant 0 : index
      %c0_11 = arith.constant 0 : index
      %16 = vector.load %arg9[%c0_10, %c0_11] : memref<256x128xf32, #tpu.memory_space<vmem>>, vector<256x128xf32>
      tpu.vector_store %arg9[%c0_10, %c0_11], %15 {strides = array<i32>} : memref<256x128xf32, #tpu.memory_space<vmem>>, vector<256x128xf32>,
    } else {
    }
    %c512_i32 = arith.constant 512 : i32
    %3 = arith.muli %arg1, %c512_i32 : i32
    %4 = tpu.assume_multiple %3, 512 : i32
    %c0 = arith.constant 0 : index
    %c0_1 = arith.constant 0 : index
    %5 = vector.load %arg2[%c0, %c0_1] : memref<256x512xf32, #tpu.memory_space<vmem>>, vector<256x512xf32>
    %6 = arith.index_cast %4 : i32 to index
    %c0_2 = arith.constant 0 : index
    %7 = vector.load %arg3[%6, %c0_2] : memref<512x128xf32, #tpu.memory_space<vmem>>, vector<512x128xf32>
    %c0_3 = arith.constant 0 : index
    %c0_4 = arith.constant 0 : index
    %8 = vector.load %arg9[%c0_3, %c0_4] : memref<256x128xf32, #tpu.memory_space<vmem>>, vector<256x128xf32>
    %cst = arith.constant dense<0.000000e+00> : vector<256x128xf32>
    %9 = tpu.matmul %5, %7, %cst {dimension_numbers = #tpu.dot_dimension_numbers<[1], [0], [0], [1], [0, 0, 1, 1], [], []>} : vector<256x512xf32>, vector<512x128xf32>, vector<256x128xf32> -> vector<256x128xf32>
    %10 = arith.addf %8, %9 : vector<256x128xf32>
    %c0_5 = arith.constant 0 : index
    %c0_6 = arith.constant 0 : index
    %11 = vector.load %arg9[%c0_5, %c0_6] : memref<256x128xf32, #tpu.memory_space<vmem>>, vector<256x128xf32>
    tpu.vector_store %arg9[%c0_5, %c0_6], %10 {strides = array<i32>} : memref<256x128xf32, #tpu.memory_space<vmem>>, vector<256x128xf32>,
    %c0_i32_7 = arith.constant 0 : i32
    %12 = arith.cmpi eq, %arg1, %c0_i32_7 : i32
    %13 = arith.extui %12 : i1 to i32
    %c0_i32_8 = arith.constant 0 : i32
    %14 = arith.cmpi ne, %13, %c0_i32_8 : i32
    scf.if %14 {
      %c256_i32 = arith.constant 256 : i32
      %15 = arith.muli %arg0, %c256_i32 : i32
      %16 = tpu.assume_multiple %15, 256 : i32
      %17 = arith.index_cast %16 : i32 to index
      %c0_9 = arith.constant 0 : index
      %18 = vector.load %arg3[%17, %c0_9] : memref<512x128xf32, #tpu.memory_space<vmem>>, vector<256x128xf32>
      %c0_10 = arith.constant 0 : index
      %c0_11 = arith.constant 0 : index
      %19 = vector.load %arg9[%c0_10, %c0_11] : memref<256x128xf32, #tpu.memory_space<vmem>>, vector<256x128xf32>
      %20 = arith.addf %18, %19 : vector<256x128xf32>
      %c0_12 = arith.constant 0 : index
      %c0_13 = arith.constant 0 : index
      %21 = vector.load %arg4[%c0_12, %c0_13] : memref<128x128xf32, #tpu.memory_space<vmem>>, vector<128x128xf32>
      %cst_14 = arith.constant dense<0.000000e+00> : vector<256x128xf32>
      %22 = tpu.matmul %20, %21, %cst_14 {dimension_numbers = #tpu.dot_dimension_numbers<[1], [0], [0], [1], [0, 0, 1, 1], [], []>} : vector<256x128xf32>, vector<128x128xf32>, vector<256x128xf32> -> vector<256x128xf32>
      %c0_15 = arith.constant 0 : index
      %c0_16 = arith.constant 0 : index
      %23 = vector.load %arg5[%c0_15, %c0_16] : memref<1x128xf32, #tpu.memory_space<vmem>>, vector<1x128xf32>
      %24 = vector.broadcast %23 : vector<1x128xf32> to vector<256x128xf32>
      %25 = arith.addf %22, %24 : vector<256x128xf32>
      %26 = arith.mulf %18, %19 : vector<256x128xf32>
      %c0_17 = arith.constant 0 : index
      %c0_18 = arith.constant 0 : index
      %27 = vector.load %arg6[%c0_17, %c0_18] : memref<128x128xf32, #tpu.memory_space<vmem>>, vector<128x128xf32>
      %cst_19 = arith.constant dense<0.000000e+00> : vector<256x128xf32>
      %28 = tpu.matmul %26, %27, %cst_19 {dimension_numbers = #tpu.dot_dimension_numbers<[1], [0], [0], [1], [0, 0, 1, 1], [], []>} : vector<256x128xf32>, vector<128x128xf32>, vector<256x128xf32> -> vector<256x128xf32>
      %c0_20 = arith.constant 0 : index
      %c0_21 = arith.constant 0 : index
      %29 = vector.load %arg7[%c0_20, %c0_21] : memref<1x128xf32, #tpu.memory_space<vmem>>, vector<1x128xf32>
      %30 = vector.broadcast %29 : vector<1x128xf32> to vector<256x128xf32>
      %31 = arith.addf %28, %30 : vector<256x128xf32>
      %cst_22 = arith.constant 0.000000e+00 : f32
      %32 = vector.broadcast %cst_22 : f32 to vector<256x128xf32>
      %33 = arith.cmpf ogt, %25, %32 : vector<256x128xf32>
      %cst_23 = arith.constant 0.00999999977 : f32
      %34 = vector.broadcast %cst_23 : f32 to vector<256x128xf32>
      %35 = arith.mulf %34, %25 : vector<256x128xf32>
      %36 = arith.select %33, %25, %35 : vector<256x128xi1>, vector<256x128xf32>
      %cst_24 = arith.constant 0.000000e+00 : f32
      %37 = vector.broadcast %cst_24 : f32 to vector<256x128xf32>
      %38 = arith.cmpf ogt, %31, %37 : vector<256x128xf32>
      %cst_25 = arith.constant 0.00999999977 : f32
      %39 = vector.broadcast %cst_25 : f32 to vector<256x128xf32>
      %40 = arith.mulf %39, %31 : vector<256x128xf32>
      %41 = arith.select %38, %31, %40 : vector<256x128xi1>, vector<256x128xf32>
      %42 = arith.addf %36, %41 : vector<256x128xf32>
      %43 = arith.mulf %42, %42 : vector<256x128xf32>
      %cst_26 = arith.constant dense<0.000000e+00> : vector<256xf32>
      %44 = vector.multi_reduction <add>, %43, %cst_26 [1] : vector<256x128xf32> to vector<256xf32>
      %45 = vector.shape_cast %44 : vector<256xf32> to vector<256x1xf32>
      %cst_27 = arith.constant 1.000000e-24 : f32
      %46 = vector.broadcast %cst_27 : f32 to vector<256x1xf32>
      %47 = arith.maximumf %45, %46 : vector<256x1xf32>
      %48 = math.rsqrt %47 : vector<256x1xf32>
      %49 = vector.broadcast %48 : vector<256x1xf32> to vector<256x128xf32>
      %50 = arith.mulf %42, %49 : vector<256x128xf32>
      %c0_28 = arith.constant 0 : index
      %c0_29 = arith.constant 0 : index
      %51 = vector.load %arg8[%c0_28, %c0_29] : memref<256x128xf32, #tpu.memory_space<vmem>>, vector<256x128xf32>
      tpu.vector_store %arg8[%c0_28, %c0_29], %50 {strides = array<i32>} : memref<256x128xf32, #tpu.memory_space<vmem>>, vector<256x128xf32>,
    } else {
    }
    return
  }
  func.func @transform_0(%arg0: i32, %arg1: i32) -> (i32, i32) {
    %c0_i32 = arith.constant 0 : i32
    return %arg0, %arg1 : i32, i32
  }
  func.func @transform_1(%arg0: i32, %arg1: i32) -> (i32, i32) {
    %c0_i32 = arith.constant 0 : i32
    %c0_i32_0 = arith.constant 0 : i32
    %c0_i32_1 = arith.constant 0 : i32
    return %c0_i32, %c0_i32_0 : i32, i32
  }
  func.func @transform_2(%arg0: i32, %arg1: i32) -> (i32, i32) {
    %c0_i32 = arith.constant 0 : i32
    %c0_i32_0 = arith.constant 0 : i32
    %c0_i32_1 = arith.constant 0 : i32
    return %c0_i32, %c0_i32_0 : i32, i32
  }
  func.func @transform_3(%arg0: i32, %arg1: i32) -> (i32, i32) {
    %c0_i32 = arith.constant 0 : i32
    %c0_i32_0 = arith.constant 0 : i32
    %c0_i32_1 = arith.constant 0 : i32
    return %c0_i32, %c0_i32_0 : i32, i32
  }
  func.func @transform_4(%arg0: i32, %arg1: i32) -> (i32, i32) {
    %c0_i32 = arith.constant 0 : i32
    %c0_i32_0 = arith.constant 0 : i32
    %c0_i32_1 = arith.constant 0 : i32
    return %c0_i32, %c0_i32_0 : i32, i32
  }
  func.func @transform_5(%arg0: i32, %arg1: i32) -> (i32, i32) {
    %c0_i32 = arith.constant 0 : i32
    %c0_i32_0 = arith.constant 0 : i32
    %c0_i32_1 = arith.constant 0 : i32
    return %c0_i32, %c0_i32_0 : i32, i32
  }
  func.func @transform_6(%arg0: i32, %arg1: i32) -> (i32, i32) {
    %c0_i32 = arith.constant 0 : i32
    %c0_i32_0 = arith.constant 0 : i32
    return %arg0, %c0_i32 : i32, i32
  }
}

</mosaic_0001>

<llo_original>
// kernel: aggregator_forward.1
$region0: #{aggregator_forward.1}
  #allocation0 [shape = 'u32[]', space=smem, size = 0x4, offset = 0x4, fixed_abs, tag = 'smem constant byte address 0x4 - core index']
  #allocation1 [shape = 'u32[144,128]{1,0:T(1,128)}', space=vmem, size = 0x12000, scoped, tag = 'internal scratch']
  #allocation2 [shape = 'f32[256,128]{1,0:T(8,128)}', space=vmem, size = 0x20000, scoped, tag = 'scratch operand']
  %s0 = inlined_call_operand.hbm [shape: f32[512,512], index: 0, kind: input, shape index: {}]
  %s1 = inlined_call_operand.hbm [shape: f32[512,128], index: 1, kind: input, shape index: {}]
  %s2 = inlined_call_operand.hbm [shape: f32[128,128], index: 2, kind: input, shape index: {}]
  %s3 = inlined_call_operand.vmem [shape: f32[1,128], index: 3, kind: input, shape index: {}]
  %s4 = inlined_call_operand.hbm [shape: f32[128,128], index: 4, kind: input, shape index: {}]
  %s5 = inlined_call_operand.vmem [shape: f32[1,128], index: 5, kind: input, shape index: {}]
  %s6 = inlined_call_operand.hbm [shape: f32[512,128], index: 6, kind: output, shape index: {}]
  %s7 = sld [smem:[#allocation0]]
  $region81: #{aggregator_forward.1} parent=0
    _
  %s9 = ssub.s32 1, %s7
  %s10 = scalar_select 0, %s9, %s7
  $region1: #{aggregator_forward.1} parent=0
    #allocation3 [shape = 'u8[1048576]{0}', space=vmem, size = 0x100000, scoped, tag = 'input window, operand 0']
    #allocation4 [shape = 's32[2]{0}', space=sflag, size = 0x8, scoped, tag = 'scoped memory for aggregator_forward.1']
    #allocation5 [shape = 's32[2]{0}', space=sflag, size = 0x8, scoped, tag = 'scoped memory for aggregator_forward.1']
    #allocation6 [shape = 'u8[262144]{0}', space=vmem, size = 0x40000, scoped, tag = 'input window, operand 1, single buffered']
    #allocation7 [shape = 's32[1]{0}', space=sflag, size = 0x4, scoped, tag = 'scoped memory for aggregator_forward.1']
    #allocation8 [shape = 'u8[65536]{0}', space=vmem, size = 0x10000, scoped, tag = 'input window, operand 2, single buffered']
    #allocation9 [shape = 'u8[65536]{0}', space=vmem, size = 0x10000, scoped, tag = 'input window, operand 4, single buffered']
    #allocation10 [shape = 's32[1]{0}', space=sflag, size = 0x4, scoped, tag = 'scoped memory for aggregator_forward.1']
    #allocation11 [shape = 'u8[262144]{0}', space=vmem, size = 0x40000, scoped, tag = 'output window, operand 0']
    %11 = vsyncpa [#allocation4], 0
    %s12 = scalar_lea.sflag [#allocation4], 1
    %13 = vsyncpa %s12, 0
    %14 = vsyncpa [#allocation7], 0
    %15 = vsyncpa [#allocation10], 0
    %16 = vsyncpa [#allocation5], 0
    %s17 = scalar_lea.sflag [#allocation5], 1
    %18 = vsyncpa %s17, 0
    loop: start=0, step=1, limit=4
    $region2: #{aggregator_forward.1} parent=1 // loop_pre_header
      _
    $region3: #{aggregator_forward.1} parent=1 // loop_header
      %s20 = sphi 0, %s24
      %p21 = scmp.ge.s32.totalorder %s20, 4
      %s27 = sphi 0, %s39
      %s28 = sphi 0, %s35
      %s29 = sphi 0, %s27
      %s30 = sphi 0, %s28
      %s31 = sphi 0, %s29
      %s32 = sphi 0, %s30
      %s44 = sphi 0, %s46
      %s47 = sphi 0, %s44
      %s48 = sphi 0, %s47
      %s64 = sphi 0, %s48
      %s68 = sphi 0, %s68
      %s70 = sphi 0, %s68
      %s71 = sphi 0, %s70
      %s85 = sphi 0, %s71
      %s89 = sphi 0, %s89
      %s91 = sphi 0, %s89
      %s92 = sphi 0, %s91
      %s106 = sphi 0, %s92
      %s110 = sphi 0, %s110
      %s112 = sphi 0, %s110
      %s113 = sphi 0, %s112
      %s127 = sphi 0, %s113
      %s131 = sphi 0, %s131
      %s133 = sphi 0, %s131
      %s134 = sphi 0, %s133
      %s148 = sphi 0, %s134
      %s152 = sphi 0, %s152
      %s154 = sphi 0, %s152
      %s155 = sphi 0, %s154
      %s169 = sphi 0, %s155
      %s175 = sphi 0, %s177
      %s178 = sphi 0, %s175
      %s179 = sphi 0, %s178
      %s195 = sphi 0, %s179
    $region4: #{aggregator_forward.1} parent=1 // loop_header_branch
      %23 = sbr.rel (%p21) target = $region8
    $region5: #{aggregator_forward.1} parent=1 // loop_body
      %s25 = ssub.s32 %s20, 1
      %s26 = ssub.s32 %s20, 2
      %s33 = sadd.s32 1, %s28
      %p34 = scmp.ge.s32.totalorder %s33, 1
      %s35 = scalar_select %p34, 0, %s33
      %s36 = sadd.s32 1, %s27
      %s37 = scalar_select %p34, %s36, %s27
      %p38 = scmp.ge.s32.totalorder %s37, 2
      %s39 = scalar_select %p38, 0, %s37
      %s40 = ssub.s32 %s27, %s39
      %s41 = ssub.s32 %s28, %s35
      %s42 = sor.u32 %s40, %s41
      %p43 = scmp.eq.s32.totalorder %s42, 0
      %s45 = sadd.s32 %s44, 1
      %s46 = scalar_select %p43, %s44, %s45
      %p49 = pneg %p43
      %p50 = scmp.eq.s32.totalorder %s20, 1
      %p51 = por %p49, %p50
      %p52 = scmp.ne.s32.totalorder %s44, %s47
      %p53 = scmp.eq.s32.totalorder %s20, 0
      %p54 = por %p52, %p53
      %p55 = scmp.ne.s32.totalorder %s44, %s47
      %p56 = scmp.eq.s32.totalorder %s25, 1
      %p57 = por %p55, %p56
      %p58 = scmp.ne.s32.totalorder %s47, %s48
      %p59 = scmp.eq.s32.totalorder %s25, 0
      %p60 = por %p58, %p59
      %p61 = scmp.ne.s32.totalorder %s47, %s48
      %p62 = scmp.eq.s32.totalorder %s26, 1
      %p63 = por %p61, %p62
      %p65 = scmp.ne.s32.totalorder %s48, %s64
      %p66 = scmp.eq.s32.totalorder %s26, 0
      %p67 = por %p65, %p66
      %s69 = sadd.s32 %s68, 1
      %p72 = scmp.eq.s32.totalorder %s20, 1
      %p73 = scmp.ne.s32.totalorder %s68, %s70
      %p74 = scmp.eq.s32.totalorder %s20, 0
      %p75 = por %p73, %p74
      %p76 = scmp.ne.s32.totalorder %s68, %s70
      %p77 = scmp.eq.s32.totalorder %s25, 1
      %p78 = por %p76, %p77
      %p79 = scmp.ne.s32.totalorder %s70, %s71
      %p80 = scmp.eq.s32.totalorder %s25, 0
      %p81 = por %p79, %p80
      %p82 = scmp.ne.s32.totalorder %s70, %s71
      %p83 = scmp.eq.s32.totalorder %s26, 1
      %p84 = por %p82, %p83
      %p86 = scmp.ne.s32.totalorder %s71, %s85
      %p87 = scmp.eq.s32.totalorder %s26, 0
      %p88 = por %p86, %p87
      %s90 = sadd.s32 %s89, 1
      %p93 = scmp.eq.s32.totalorder %s20, 1
      %p94 = scmp.ne.s32.totalorder %s89, %s91
      %p95 = scmp.eq.s32.totalorder %s20, 0
      %p96 = por %p94, %p95
      %p97 = scmp.ne.s32.totalorder %s89, %s91
      %p98 = scmp.eq.s32.totalorder %s25, 1
      %p99 = por %p97, %p98
      %p100 = scmp.ne.s32.totalorder %s91, %s92
      %p101 = scmp.eq.s32.totalorder %s25, 0
      %p102 = por %p100, %p101
      %p103 = scmp.ne.s32.totalorder %s91, %s92
      %p104 = scmp.eq.s32.totalorder %s26, 1
      %p105 = por %p103, %p104
      %p107 = scmp.ne.s32.totalorder %s92, %s106
      %p108 = scmp.eq.s32.totalorder %s26, 0
      %p109 = por %p107, %p108
      %s111 = sadd.s32 %s110, 1
      %p114 = scmp.eq.s32.totalorder %s20, 1
      %p115 = scmp.ne.s32.totalorder %s110, %s112
      %p116 = scmp.eq.s32.totalorder %s20, 0
      %p117 = por %p115, %p116
      %p118 = scmp.ne.s32.totalorder %s110, %s112
      %p119 = scmp.eq.s32.totalorder %s25, 1
      %p120 = por %p118, %p119
      %p121 = scmp.ne.s32.totalorder %s112, %s113
      %p122 = scmp.eq.s32.totalorder %s25, 0
      %p123 = por %p121, %p122
      %p124 = scmp.ne.s32.totalorder %s112, %s113
      %p125 = scmp.eq.s32.totalorder %s26, 1
      %p126 = por %p124, %p125
      %p128 = scmp.ne.s32.totalorder %s113, %s127
      %p129 = scmp.eq.s32.totalorder %s26, 0
      %p130 = por %p128, %p129
      %s132 = sadd.s32 %s131, 1
      %p135 = scmp.eq.s32.totalorder %s20, 1
      %p136 = scmp.ne.s32.totalorder %s131, %s133
      %p137 = scmp.eq.s32.totalorder %s20, 0
      %p138 = por %p136, %p137
      %p139 = scmp.ne.s32.totalorder %s131, %s133
      %p140 = scmp.eq.s32.totalorder %s25, 1
      %p141 = por %p139, %p140
      %p142 = scmp.ne.s32.totalorder %s133, %s134
      %p143 = scmp.eq.s32.totalorder %s25, 0
      %p144 = por %p142, %p143
      %p145 = scmp.ne.s32.totalorder %s133, %s134
      %p146 = scmp.eq.s32.totalorder %s26, 1
      %p147 = por %p145, %p146
      %p149 = scmp.ne.s32.totalorder %s134, %s148
      %p150 = scmp.eq.s32.totalorder %s26, 0
      %p151 = por %p149, %p150
      %s153 = sadd.s32 %s152, 1
      %p156 = scmp.eq.s32.totalorder %s20, 1
      %p157 = scmp.ne.s32.totalorder %s152, %s154
      %p158 = scmp.eq.s32.totalorder %s20, 0
      %p159 = por %p157, %p158
      %p160 = scmp.ne.s32.totalorder %s152, %s154
      %p161 = scmp.eq.s32.totalorder %s25, 1
      %p162 = por %p160, %p161
      %p163 = scmp.ne.s32.totalorder %s154, %s155
      %p164 = scmp.eq.s32.totalorder %s25, 0
      %p165 = por %p163, %p164
      %p166 = scmp.ne.s32.totalorder %s154, %s155
      %p167 = scmp.eq.s32.totalorder %s26, 1
      %p168 = por %p166, %p167
      %p170 = scmp.ne.s32.totalorder %s155, %s169
      %p171 = scmp.eq.s32.totalorder %s26, 0
      %p172 = por %p170, %p171
      %s173 = ssub.s32 %s27, %s39
      %p174 = scmp.eq.s32.totalorder %s173, 0
      %s176 = sadd.s32 %s175, 1
      %s177 = scalar_select %p174, %s175, %s176
      %p180 = pneg %p174
      %p181 = scmp.eq.s32.totalorder %s20, 1
      %p182 = por %p180, %p181
      %p183 = scmp.ne.s32.totalorder %s175, %s178
      %p184 = scmp.eq.s32.totalorder %s20, 0
      %p185 = por %p183, %p184
      %p186 = scmp.ne.s32.totalorder %s175, %s178
      %p187 = scmp.eq.s32.totalorder %s25, 1
      %p188 = por %p186, %p187
      %p189 = scmp.ne.s32.totalorder %s178, %s179
      %p190 = scmp.eq.s32.totalorder %s25, 0
      %p191 = por %p189, %p190
      %p192 = scmp.ne.s32.totalorder %s178, %s179
      %p193 = scmp.eq.s32.totalorder %s26, 1
      %p194 = por %p192, %p193
      %p196 = scmp.ne.s32.totalorder %s179, %s195
      %p197 = scmp.eq.s32.totalorder %s26, 0
      %p198 = por %p196, %p197
      %p199 = scmp.le.s32.totalorder 1, %s20
      %p200 = scmp.lt.s32.totalorder %s20, 3
      %p201 = pnand %p199, %p200
      %p202 = pneg %p201
      // Predicated region
      $region9: #{aggregator_forward.1} parent=5 // pred_check
        _
      $region10: #{aggregator_forward.1} parent=5 // pred_check_branch
        %204 = sbr.rel (%p201) target = $region12
      $region11: #{aggregator_forward.1} parent=5 // pred_region
        %s205 = ssub.s32 %s20, 1
        // Predicated region
        $region13: #{aggregator_forward.1} parent=11 // pred_check
          %p206 = pneg %p81
        $region14: #{aggregator_forward.1} parent=11 // pred_check_branch
          %208 = sbr.rel (%p206) target = $region16
        $region15: #{aggregator_forward.1} parent=11 // pred_region
          %s210 = ssub.s32 8192, 8192
          %211 = vsyncadd [#allocation7], %s210
          %s212 = sshll.u32 [#allocation6], 4
          %s213 = int_to_ptr.vmem [resolvable:$true] %s212
          %218 = dma.hbm_to_vmem [thread:$0]  %s1, 8192, %s213, [#allocation7], 128, 128, 8
        $region16: #{aggregator_forward.1} parent=11 // pred_fallthru
          _
        // Predicated region
        $region17: #{aggregator_forward.1} parent=11 // pred_check
          %p219 = pneg %p102
        $region18: #{aggregator_forward.1} parent=11 // pred_check_branch
          %221 = sbr.rel (%p219) target = $region20
        $region19: #{aggregator_forward.1} parent=11 // pred_region
          %s223 = ssub.s32 2048, 2048
          %224 = vsyncadd [#allocation7], %s223
          %s225 = sshll.u32 [#allocation8], 4
          %s226 = int_to_ptr.vmem [resolvable:$true] %s225
          %231 = dma.hbm_to_vmem [thread:$0]  %s2, 2048, %s226, [#allocation7], 128, 128, 8
        $region20: #{aggregator_forward.1} parent=11 // pred_fallthru
          _
        // Predicated region
        $region21: #{aggregator_forward.1} parent=11 // pred_check
          %p232 = pneg %p123
        $region22: #{aggregator_forward.1} parent=11 // pred_check_branch
          %234 = sbr.rel (%p232) target = $region24
        $region23: #{aggregator_forward.1} parent=11 // pred_region
          _
        $region24: #{aggregator_forward.1} parent=11 // pred_fallthru
          _
        // Predicated region
        $region25: #{aggregator_forward.1} parent=11 // pred_check
          %p235 = pneg %p144
        $region26: #{aggregator_forward.1} parent=11 // pred_check_branch
          %237 = sbr.rel (%p235) target = $region28
        $region27: #{aggregator_forward.1} parent=11 // pred_region
          %s239 = ssub.s32 2048, 2048
          %240 = vsyncadd [#allocation10], %s239
          %s241 = sshll.u32 [#allocation9], 4
          %s242 = int_to_ptr.vmem [resolvable:$true] %s241
          %247 = dma.hbm_to_vmem [thread:$0]  %s4, 2048, %s242, [#allocation10], 128, 128, 8
        $region28: #{aggregator_forward.1} parent=11 // pred_fallthru
          _
        // Predicated region
        $region29: #{aggregator_forward.1} parent=11 // pred_check
          %p248 = pneg %p165
        $region30: #{aggregator_forward.1} parent=11 // pred_check_branch
          %250 = sbr.rel (%p248) target = $region32
        $region31: #{aggregator_forward.1} parent=11 // pred_region
          _
        $region32: #{aggregator_forward.1} parent=11 // pred_fallthru
          _
      $region12: #{aggregator_forward.1} parent=5 // pred_fallthru
        _
      %p251 = scmp.lt.s32.totalorder %s20, 2
      // Predicated region
      $region33: #{aggregator_forward.1} parent=5 // pred_check
        %p252 = pneg %p251
      $region34: #{aggregator_forward.1} parent=5 // pred_check_branch
        %254 = sbr.rel (%p252) target = $region36
      $region35: #{aggregator_forward.1} parent=5 // pred_region
        // Predicated region
        $region37: #{aggregator_forward.1} parent=35 // pred_check
          %p255 = pneg %p54
        $region38: #{aggregator_forward.1} parent=35 // pred_check_branch
          %257 = sbr.rel (%p255) target = $region40
        $region39: #{aggregator_forward.1} parent=35 // pred_region
          %s258 = sand.u32 %s44, 1
          %s259 = scalar_lea.sflag [#allocation4], %s258
          %s260 = sand.u32 %s44, 1
          %s261 = smul.addr %s260, 1024
          %s262 = scalar_lea.vmem [#allocation3], %s261
          %s263 = smul.u32 32, %s27
          %s264 = smul.u32 4, %s28
          %s266 = ssub.s32 16384, 16384
          %267 = vsyncadd %s259, %s266
          %s268 = smul.addr %s263, 4
          %s269 = sadd.s32 %s264, %s268
          %s270 = smul.addr %s269, 128
          %s271 = scalar_lea.hbm %s0, %s270
          %s272 = sshll.u32 %s262, 4
          %s273 = int_to_ptr.vmem [resolvable:$true] %s272
          %278 = dma.hbm_to_vmem [thread:$0]  %s271, 16384, %s273, %s259, 512, 512, 32
        $region40: #{aggregator_forward.1} parent=35 // pred_fallthru
          _
      $region36: #{aggregator_forward.1} parent=5 // pred_fallthru
        _
      %p279 = scmp.le.s32.totalorder 1, %s20
      %p280 = scmp.lt.s32.totalorder %s20, 3
      %p281 = pnand %p279, %p280
      %p282 = pneg %p281
      // Predicated region
      $region41: #{aggregator_forward.1} parent=5 // pred_check
        _
      $region42: #{aggregator_forward.1} parent=5 // pred_check_branch
        %284 = sbr.rel (%p281) target = $region44
      $region43: #{aggregator_forward.1} parent=5 // pred_region
        %s285 = ssub.s32 %s20, 1
        %s286 = sand.u32 %s47, 1
        %s287 = scalar_lea.sflag [#allocation4], %s286
        %s288 = sand.u32 %s47, 1
        %s289 = smul.addr %s288, 1024
        %s290 = scalar_lea.vmem [#allocation3], %s289
        // Predicated region
        $region45: #{aggregator_forward.1} parent=43 // pred_check
          %p291 = pneg %p60
        $region46: #{aggregator_forward.1} parent=43 // pred_check_branch
          %293 = sbr.rel (%p291) target = $region48
        $region47: #{aggregator_forward.1} parent=43 // pred_region
          %294 = dma.done %s287, 16384
        $region48: #{aggregator_forward.1} parent=43 // pred_fallthru
          _
        // Predicated region
        $region49: #{aggregator_forward.1} parent=43 // pred_check
          %p295 = pneg %p81
        $region50: #{aggregator_forward.1} parent=43 // pred_check_branch
          %297 = sbr.rel (%p295) target = $region52
        $region51: #{aggregator_forward.1} parent=43 // pred_region
          %298 = dma.done [#allocation7], 8192
        $region52: #{aggregator_forward.1} parent=43 // pred_fallthru
          _
        // Predicated region
        $region53: #{aggregator_forward.1} parent=43 // pred_check
          %p299 = pneg %p102
        $region54: #{aggregator_forward.1} parent=43 // pred_check_branch
          %301 = sbr.rel (%p299) target = $region56
        $region55: #{aggregator_forward.1} parent=43 // pred_region
          %302 = dma.done [#allocation7], 2048
        $region56: #{aggregator_forward.1} parent=43 // pred_fallthru
          _
        // Predicated region
        $region57: #{aggregator_forward.1} parent=43 // pred_check
          %p303 = pneg %p144
        $region58: #{aggregator_forward.1} parent=43 // pred_check_branch
          %305 = sbr.rel (%p303) target = $region60
        $region59: #{aggregator_forward.1} parent=43 // pred_region
          %306 = dma.done [#allocation10], 2048
        $region60: #{aggregator_forward.1} parent=43 // pred_fallthru
          _
        %s307 = sand.u32 %s47, 1
        %s308 = scalar_lea.sflag [#allocation4], %s307
        %s309 = sand.u32 %s47, 1
        %s310 = smul.addr %s309, 1024
        %s311 = scalar_lea.vmem [#allocation3], %s310
        %p312 = pneg %p60
        %p313 = pneg %p57
        %p314 = pneg %p81
        %p315 = pneg %p78
        %p316 = pneg %p102
        %p317 = pneg %p99
        %p318 = pneg %p123
        %p319 = pneg %p120
        %p320 = pneg %p144
        %p321 = pneg %p141
        %p322 = pneg %p165
        %p323 = pneg %p162
        %p324 = pneg %p191
        %p325 = pneg %p188
        %s326 = sand.u32 %s178, 1
        %s327 = scalar_lea.sflag [#allocation5], %s326
        %s328 = sand.u32 %s178, 1
        %s329 = smul.addr %s328, 256
        %s330 = scalar_lea.vmem [#allocation11], %s329
        %s331 = smul.u32 32, %s29
        %s332 = smul.u32 4, %s30
        %s333 = smul.u32 32, %s29
        %p334 = scmp.eq.s32.totalorder %s30, 0
        // Predicated region
        $region61: #{aggregator_forward.1} parent=43 // pred_check
          %p335 = pneg %p334
        $region62: #{aggregator_forward.1} parent=43 // pred_check_branch
          %337 = sbr.rel (%p335) target = $region64
        $region63: #{aggregator_forward.1} parent=43 // pred_region
          %338 = vst [vmem:[#allocation2] sm:$0xff] 0.0
          %339 = vst [vmem:[#allocation2 + $0x8] sm:$0xff] 0.0
          %340 = vst [vmem:[#allocation2 + $0x10] sm:$0xff] 0.0
          %341 = vst [vmem:[#allocation2 + $0x18] sm:$0xff] 0.0
          %342 = vst [vmem:[#allocation2 + $0x20] sm:$0xff] 0.0
          %343 = vst [vmem:[#allocation2 + $0x28] sm:$0xff] 0.0
          %344 = vst [vmem:[#allocation2 + $0x30] sm:$0xff] 0.0
          %345 = vst [vmem:[#allocation2 + $0x38] sm:$0xff] 0.0
          %346 = vst [vmem:[#allocation2 + $0x40] sm:$0xff] 0.0
          %347 = vst [vmem:[#allocation2 + $0x48] sm:$0xff] 0.0
          %348 = vst [vmem:[#allocation2 + $0x50] sm:$0xff] 0.0
          %349 = vst [vmem:[#allocation2 + $0x58] sm:$0xff] 0.0
          %350 = vst [vmem:[#allocation2 + $0x60] sm:$0xff] 0.0
          %351 = vst [vmem:[#allocation2 + $0x68] sm:$0xff] 0.0
          %352 = vst [vmem:[#allocation2 + $0x70] sm:$0xff] 0.0
          %353 = vst [vmem:[#allocation2 + $0x78] sm:$0xff] 0.0
          %354 = vst [vmem:[#allocation2 + $0x80] sm:$0xff] 0.0
          %355 = vst [vmem:[#allocation2 + $0x88] sm:$0xff] 0.0
          %356 = vst [vmem:[#allocation2 + $0x90] sm:$0xff] 0.0
          %357 = vst [vmem:[#allocation2 + $0x98] sm:$0xff] 0.0
          %358 = vst [vmem:[#allocation2 + $0xa0] sm:$0xff] 0.0
          %359 = vst [vmem:[#allocation2 + $0xa8] sm:$0xff] 0.0
          %360 = vst [vmem:[#allocation2 + $0xb0] sm:$0xff] 0.0
          %361 = vst [vmem:[#allocation2 + $0xb8] sm:$0xff] 0.0
          %362 = vst [vmem:[#allocation2 + $0xc0] sm:$0xff] 0.0
          %363 = vst [vmem:[#allocation2 + $0xc8] sm:$0xff] 0.0
          %364 = vst [vmem:[#allocation2 + $0xd0] sm:$0xff] 0.0
          %365 = vst [vmem:[#allocation2 + $0xd8] sm:$0xff] 0.0
          %366 = vst [vmem:[#allocation2 + $0xe0] sm:$0xff] 0.0
          %367 = vst [vmem:[#allocation2 + $0xe8] sm:$0xff] 0.0
          %368 = vst [vmem:[#allocation2 + $0xf0] sm:$0xff] 0.0
          %369 = vst [vmem:[#allocation2 + $0xf8] sm:$0xff] 0.0
        $region64: #{aggregator_forward.1} parent=43 // pred_fallthru
          _
        %s370 = smul.u32 %s30, 512
        %v371 = vld [vmem:[%s290] sm:$0xff]
        %v372 = vld [vmem:[%s290 + $0x8] sm:$0xff]
        %v373 = vld [vmem:[%s290 + $0x10] sm:$0xff]
        %v374 = vld [vmem:[%s290 + $0x18] sm:$0xff]
        %v375 = vld [vmem:[%s290 + $0x20] sm:$0xff]
        %v376 = vld [vmem:[%s290 + $0x28] sm:$0xff]
        %v377 = vld [vmem:[%s290 + $0x30] sm:$0xff]
        %v378 = vld [vmem:[%s290 + $0x38] sm:$0xff]
        %v379 = vld [vmem:[%s290 + $0x40] sm:$0xff]
        %v380 = vld [vmem:[%s290 + $0x48] sm:$0xff]
        %v381 = vld [vmem:[%s290 + $0x50] sm:$0xff]
        %v382 = vld [vmem:[%s290 + $0x58] sm:$0xff]
        %v383 = vld [vmem:[%s290 + $0x60] sm:$0xff]
        %v384 = vld [vmem:[%s290 + $0x68] sm:$0xff]
        %v385 = vld [vmem:[%s290 + $0x70] sm:$0xff]
        %v386 = vld [vmem:[%s290 + $0x78] sm:$0xff]
        %v387 = vld [vmem:[%s290 + $0x80] sm:$0xff]
        %v388 = vld [vmem:[%s290 + $0x88] sm:$0xff]
        %v389 = vld [vmem:[%s290 + $0x90] sm:$0xff]
        %v390 = vld [vmem:[%s290 + $0x98] sm:$0xff]
        %v391 = vld [vmem:[%s290 + $0xa0] sm:$0xff]
        %v392 = vld [vmem:[%s290 + $0xa8] sm:$0xff]
        %v393 = vld [vmem:[%s290 + $0xb0] sm:$0xff]
        %v394 = vld [vmem:[%s290 + $0xb8] sm:$0xff]
        %v395 = vld [vmem:[%s290 + $0xc0] sm:$0xff]
        %v396 = vld [vmem:[%s290 + $0xc8] sm:$0xff]
        %v397 = vld [vmem:[%s290 + $0xd0] sm:$0xff]
        %v398 = vld [vmem:[%s290 + $0xd8] sm:$0xff]
        %v399 = vld [vmem:[%s290 + $0xe0] sm:$0xff]
        %v400 = vld [vmem:[%s290 + $0xe8] sm:$0xff]
        %v401 = vld [vmem:[%s290 + $0xf0] sm:$0xff]
        %v402 = vld [vmem:[%s290 + $0xf8] sm:$0xff]
        %v403 = vld [vmem:[%s290 + $0x100] sm:$0xff]
        %v404 = vld [vmem:[%s290 + $0x108] sm:$0xff]
        %v405 = vld [vmem:[%s290 + $0x110] sm:$0xff]
        %v406 = vld [vmem:[%s290 + $0x118] sm:$0xff]
        %v407 = vld [vmem:[%s290 + $0x120] sm:$0xff]
        %v408 = vld [vmem:[%s290 + $0x128] sm:$0xff]
        %v409 = vld [vmem:[%s290 + $0x130] sm:$0xff]
        %v410 = vld [vmem:[%s290 + $0x138] sm:$0xff]
        %v411 = vld [vmem:[%s290 + $0x140] sm:$0xff]
        %v412 = vld [vmem:[%s290 + $0x148] sm:$0xff]
        %v413 = vld [vmem:[%s290 + $0x150] sm:$0xff]
        %v414 = vld [vmem:[%s290 + $0x158] sm:$0xff]
        %v415 = vld [vmem:[%s290 + $0x160] sm:$0xff]
        %v416 = vld [vmem:[%s290 + $0x168] sm:$0xff]
        %v417 = vld [vmem:[%s290 + $0x170] sm:$0xff]
        %v418 = vld [vmem:[%s290 + $0x178] sm:$0xff]
        %v419 = vld [vmem:[%s290 + $0x180] sm:$0xff]
        %v420 = vld [vmem:[%s290 + $0x188] sm:$0xff]
        %v421 = vld [vmem:[%s290 + $0x190] sm:$0xff]
        %v422 = vld [vmem:[%s290 + $0x198] sm:$0xff]
        %v423 = vld [vmem:[%s290 + $0x1a0] sm:$0xff]
        %v424 = vld [vmem:[%s290 + $0x1a8] sm:$0xff]
        %v425 = vld [vmem:[%s290 + $0x1b0] sm:$0xff]
        %v426 = vld [vmem:[%s290 + $0x1b8] sm:$0xff]
        %v427 = vld [vmem:[%s290 + $0x1c0] sm:$0xff]
        %v428 = vld [vmem:[%s290 + $0x1c8] sm:$0xff]
        %v429 = vld [vmem:[%s290 + $0x1d0] sm:$0xff]
        %v430 = vld [vmem:[%s290 + $0x1d8] sm:$0xff]
        %v431 = vld [vmem:[%s290 + $0x1e0] sm:$0xff]
        %v432 = vld [vmem:[%s290 + $0x1e8] sm:$0xff]
        %v433 = vld [vmem:[%s290 + $0x1f0] sm:$0xff]
        %v434 = vld [vmem:[%s290 + $0x1f8] sm:$0xff]
        %v435 = vld [vmem:[%s290 + $0x200] sm:$0xff]
        %v436 = vld [vmem:[%s290 + $0x208] sm:$0xff]
        %v437 = vld [vmem:[%s290 + $0x210] sm:$0xff]
        %v438 = vld [vmem:[%s290 + $0x218] sm:$0xff]
        %v439 = vld [vmem:[%s290 + $0x220] sm:$0xff]
        %v440 = vld [vmem:[%s290 + $0x228] sm:$0xff]
        %v441 = vld [vmem:[%s290 + $0x230] sm:$0xff]
        %v442 = vld [vmem:[%s290 + $0x238] sm:$0xff]
        %v443 = vld [vmem:[%s290 + $0x240] sm:$0xff]
        %v444 = vld [vmem:[%s290 + $0x248] sm:$0xff]
        %v445 = vld [vmem:[%s290 + $0x250] sm:$0xff]
        %v446 = vld [vmem:[%s290 + $0x258] sm:$0xff]
        %v447 = vld [vmem:[%s290 + $0x260] sm:$0xff]
        %v448 = vld [vmem:[%s290 + $0x268] sm:$0xff]
        %v449 = vld [vmem:[%s290 + $0x270] sm:$0xff]
        %v450 = vld [vmem:[%s290 + $0x278] sm:$0xff]
        %v451 = vld [vmem:[%s290 + $0x280] sm:$0xff]
        %v452 = vld [vmem:[%s290 + $0x288] sm:$0xff]
        %v453 = vld [vmem:[%s290 + $0x290] sm:$0xff]
        %v454 = vld [vmem:[%s290 + $0x298] sm:$0xff]
        %v455 = vld [vmem:[%s290 + $0x2a0] sm:$0xff]
        %v456 = vld [vmem:[%s290 + $0x2a8] sm:$0xff]
        %v457 = vld [vmem:[%s290 + $0x2b0] sm:$0xff]
        %v458 = vld [vmem:[%s290 + $0x2b8] sm:$0xff]
        %v459 = vld [vmem:[%s290 + $0x2c0] sm:$0xff]
        %v460 = vld [vmem:[%s290 + $0x2c8] sm:$0xff]
        %v461 = vld [vmem:[%s290 + $0x2d0] sm:$0xff]
        %v462 = vld [vmem:[%s290 + $0x2d8] sm:$0xff]
        %v463 = vld [vmem:[%s290 + $0x2e0] sm:$0xff]
        %v464 = vld [vmem:[%s290 + $0x2e8] sm:$0xff]
        %v465 = vld [vmem:[%s290 + $0x2f0] sm:$0xff]
        %v466 = vld [vmem:[%s290 + $0x2f8] sm:$0xff]
        %v467 = vld [vmem:[%s290 + $0x300] sm:$0xff]
        %v468 = vld [vmem:[%s290 + $0x308] sm:$0xff]
        %v469 = vld [vmem:[%s290 + $0x310] sm:$0xff]
        %v470 = vld [vmem:[%s290 + $0x318] sm:$0xff]
        %v471 = vld [vmem:[%s290 + $0x320] sm:$0xff]
        %v472 = vld [vmem:[%s290 + $0x328] sm:$0xff]
        %v473 = vld [vmem:[%s290 + $0x330] sm:$0xff]
        %v474 = vld [vmem:[%s290 + $0x338] sm:$0xff]
        %v475 = vld [vmem:[%s290 + $0x340] sm:$0xff]
        %v476 = vld [vmem:[%s290 + $0x348] sm:$0xff]
        %v477 = vld [vmem:[%s290 + $0x350] sm:$0xff]
        %v478 = vld [vmem:[%s290 + $0x358] sm:$0xff]
        %v479 = vld [vmem:[%s290 + $0x360] sm:$0xff]
        %v480 = vld [vmem:[%s290 + $0x368] sm:$0xff]
        %v481 = vld [vmem:[%s290 + $0x370] sm:$0xff]
        %v482 = vld [vmem:[%s290 + $0x378] sm:$0xff]
        %v483 = vld [vmem:[%s290 + $0x380] sm:$0xff]
        %v484 = vld [vmem:[%s290 + $0x388] sm:$0xff]
        %v485 = vld [vmem:[%s290 + $0x390] sm:$0xff]
        %v486 = vld [vmem:[%s290 + $0x398] sm:$0xff]
        %v487 = vld [vmem:[%s290 + $0x3a0] sm:$0xff]
        %v488 = vld [vmem:[%s290 + $0x3a8] sm:$0xff]
        %v489 = vld [vmem:[%s290 + $0x3b0] sm:$0xff]
        %v490 = vld [vmem:[%s290 + $0x3b8] sm:$0xff]
        %v491 = vld [vmem:[%s290 + $0x3c0] sm:$0xff]
        %v492 = vld [vmem:[%s290 + $0x3c8] sm:$0xff]
        %v493 = vld [vmem:[%s290 + $0x3d0] sm:$0xff]
        %v494 = vld [vmem:[%s290 + $0x3d8] sm:$0xff]
        %v495 = vld [vmem:[%s290 + $0x3e0] sm:$0xff]
        %v496 = vld [vmem:[%s290 + $0x3e8] sm:$0xff]
        %v497 = vld [vmem:[%s290 + $0x3f0] sm:$0xff]
        %v498 = vld [vmem:[%s290 + $0x3f8] sm:$0xff]
        %s499 = scalar_lea.vmem [#allocation6], %s370
        %v500 = vld [vmem:[%s499] sm:$0xff]
        %v501 = vld [vmem:[%s499 + $0x8] sm:$0xff]
        %v502 = vld [vmem:[%s499 + $0x10] sm:$0xff]
        %v503 = vld [vmem:[%s499 + $0x18] sm:$0xff]
        %v504 = vld [vmem:[%s499 + $0x20] sm:$0xff]
        %v505 = vld [vmem:[%s499 + $0x28] sm:$0xff]
        %v506 = vld [vmem:[%s499 + $0x30] sm:$0xff]
        %v507 = vld [vmem:[%s499 + $0x38] sm:$0xff]
        %v508 = vld [vmem:[%s499 + $0x40] sm:$0xff]
        %v509 = vld [vmem:[%s499 + $0x48] sm:$0xff]
        %v510 = vld [vmem:[%s499 + $0x50] sm:$0xff]
        %v511 = vld [vmem:[%s499 + $0x58] sm:$0xff]
        %v512 = vld [vmem:[%s499 + $0x60] sm:$0xff]
        %v513 = vld [vmem:[%s499 + $0x68] sm:$0xff]
        %v514 = vld [vmem:[%s499 + $0x70] sm:$0xff]
        %v515 = vld [vmem:[%s499 + $0x78] sm:$0xff]
        %v516 = vld [vmem:[%s499 + $0x80] sm:$0xff]
        %v517 = vld [vmem:[%s499 + $0x88] sm:$0xff]
        %v518 = vld [vmem:[%s499 + $0x90] sm:$0xff]
        %v519 = vld [vmem:[%s499 + $0x98] sm:$0xff]
        %v520 = vld [vmem:[%s499 + $0xa0] sm:$0xff]
        %v521 = vld [vmem:[%s499 + $0xa8] sm:$0xff]
        %v522 = vld [vmem:[%s499 + $0xb0] sm:$0xff]
        %v523 = vld [vmem:[%s499 + $0xb8] sm:$0xff]
        %v524 = vld [vmem:[%s499 + $0xc0] sm:$0xff]
        %v525 = vld [vmem:[%s499 + $0xc8] sm:$0xff]
        %v526 = vld [vmem:[%s499 + $0xd0] sm:$0xff]
        %v527 = vld [vmem:[%s499 + $0xd8] sm:$0xff]
        %v528 = vld [vmem:[%s499 + $0xe0] sm:$0xff]
        %v529 = vld [vmem:[%s499 + $0xe8] sm:$0xff]
        %v530 = vld [vmem:[%s499 + $0xf0] sm:$0xff]
        %v531 = vld [vmem:[%s499 + $0xf8] sm:$0xff]
        %v532 = vld [vmem:[%s499 + $0x100] sm:$0xff]
        %v533 = vld [vmem:[%s499 + $0x108] sm:$0xff]
        %v534 = vld [vmem:[%s499 + $0x110] sm:$0xff]
        %v535 = vld [vmem:[%s499 + $0x118] sm:$0xff]
        %v536 = vld [vmem:[%s499 + $0x120] sm:$0xff]
        %v537 = vld [vmem:[%s499 + $0x128] sm:$0xff]
        %v538 = vld [vmem:[%s499 + $0x130] sm:$0xff]
        %v539 = vld [vmem:[%s499 + $0x138] sm:$0xff]
        %v540 = vld [vmem:[%s499 + $0x140] sm:$0xff]
        %v541 = vld [vmem:[%s499 + $0x148] sm:$0xff]
        %v542 = vld [vmem:[%s499 + $0x150] sm:$0xff]
        %v543 = vld [vmem:[%s499 + $0x158] sm:$0xff]
        %v544 = vld [vmem:[%s499 + $0x160] sm:$0xff]
        %v545 = vld [vmem:[%s499 + $0x168] sm:$0xff]
        %v546 = vld [vmem:[%s499 + $0x170] sm:$0xff]
        %v547 = vld [vmem:[%s499 + $0x178] sm:$0xff]
        %v548 = vld [vmem:[%s499 + $0x180] sm:$0xff]
        %v549 = vld [vmem:[%s499 + $0x188] sm:$0xff]
        %v550 = vld [vmem:[%s499 + $0x190] sm:$0xff]
        %v551 = vld [vmem:[%s499 + $0x198] sm:$0xff]
        %v552 = vld [vmem:[%s499 + $0x1a0] sm:$0xff]
        %v553 = vld [vmem:[%s499 + $0x1a8] sm:$0xff]
        %v554 = vld [vmem:[%s499 + $0x1b0] sm:$0xff]
        %v555 = vld [vmem:[%s499 + $0x1b8] sm:$0xff]
        %v556 = vld [vmem:[%s499 + $0x1c0] sm:$0xff]
        %v557 = vld [vmem:[%s499 + $0x1c8] sm:$0xff]
        %v558 = vld [vmem:[%s499 + $0x1d0] sm:$0xff]
        %v559 = vld [vmem:[%s499 + $0x1d8] sm:$0xff]
        %v560 = vld [vmem:[%s499 + $0x1e0] sm:$0xff]
        %v561 = vld [vmem:[%s499 + $0x1e8] sm:$0xff]
        %v562 = vld [vmem:[%s499 + $0x1f0] sm:$0xff]
        %v563 = vld [vmem:[%s499 + $0x1f8] sm:$0xff]
        %v564 = vld [vmem:[#allocation2] sm:$0xff]
        %v565 = vld [vmem:[#allocation2 + $0x8] sm:$0xff]
        %v566 = vld [vmem:[#allocation2 + $0x10] sm:$0xff]
        %v567 = vld [vmem:[#allocation2 + $0x18] sm:$0xff]
        %v568 = vld [vmem:[#allocation2 + $0x20] sm:$0xff]
        %v569 = vld [vmem:[#allocation2 + $0x28] sm:$0xff]
        %v570 = vld [vmem:[#allocation2 + $0x30] sm:$0xff]
        %v571 = vld [vmem:[#allocation2 + $0x38] sm:$0xff]
        %v572 = vld [vmem:[#allocation2 + $0x40] sm:$0xff]
        %v573 = vld [vmem:[#allocation2 + $0x48] sm:$0xff]
        %v574 = vld [vmem:[#allocation2 + $0x50] sm:$0xff]
        %v575 = vld [vmem:[#allocation2 + $0x58] sm:$0xff]
        %v576 = vld [vmem:[#allocation2 + $0x60] sm:$0xff]
        %v577 = vld [vmem:[#allocation2 + $0x68] sm:$0xff]
        %v578 = vld [vmem:[#allocation2 + $0x70] sm:$0xff]
        %v579 = vld [vmem:[#allocation2 + $0x78] sm:$0xff]
        %v580 = vld [vmem:[#allocation2 + $0x80] sm:$0xff]
        %v581 = vld [vmem:[#allocation2 + $0x88] sm:$0xff]
        %v582 = vld [vmem:[#allocation2 + $0x90] sm:$0xff]
        %v583 = vld [vmem:[#allocation2 + $0x98] sm:$0xff]
        %v584 = vld [vmem:[#allocation2 + $0xa0] sm:$0xff]
        %v585 = vld [vmem:[#allocation2 + $0xa8] sm:$0xff]
        %v586 = vld [vmem:[#allocation2 + $0xb0] sm:$0xff]
        %v587 = vld [vmem:[#allocation2 + $0xb8] sm:$0xff]
        %v588 = vld [vmem:[#allocation2 + $0xc0] sm:$0xff]
        %v589 = vld [vmem:[#allocation2 + $0xc8] sm:$0xff]
        %v590 = vld [vmem:[#allocation2 + $0xd0] sm:$0xff]
        %v591 = vld [vmem:[#allocation2 + $0xd8] sm:$0xff]
        %v592 = vld [vmem:[#allocation2 + $0xe0] sm:$0xff]
        %v593 = vld [vmem:[#allocation2 + $0xe8] sm:$0xff]
        %v594 = vld [vmem:[#allocation2 + $0xf0] sm:$0xff]
        %v595 = vld [vmem:[#allocation2 + $0xf8] sm:$0xff]
        %596 = vmatprep.subr.mxu0 0.0
        %597 = vmatpush1.msra.mxu0 %v500
        %598 = vmatprep.subr.mxu0 0.0
        %599 = vmatpush1.msra.mxu0 %v501
        %600 = vmatprep.subr.mxu0 0.0
        %601 = vmatpush1.msra.mxu0 %v502
        %602 = vmatprep.subr.mxu0 0.0
        %603 = vmatpush1.msra.mxu0 %v503
        %604 = vmatprep.subr.mxu0 0.0
        %605 = vmatpush1.msra.mxu0 %v504
        %606 = vmatprep.subr.mxu0 0.0
        %607 = vmatpush1.msra.mxu0 %v505
        %608 = vmatprep.subr.mxu0 0.0
        %609 = vmatpush1.msra.mxu0 %v506
        %610 = vmatprep.subr.mxu0 0.0
        %611 = vmatpush1.msra.mxu0 %v507
        %612 = vmatprep.subr.mxu0 0.0
        %613 = vmatpush1.msra.mxu0 %v508
        %614 = vmatprep.subr.mxu0 0.0
        %615 = vmatpush1.msra.mxu0 %v509
        %616 = vmatprep.subr.mxu0 0.0
        %617 = vmatpush1.msra.mxu0 %v510
        %618 = vmatprep.subr.mxu0 0.0
        %619 = vmatpush1.msra.mxu0 %v511
        %620 = vmatprep.subr.mxu0 0.0
        %621 = vmatpush1.msra.mxu0 %v512
        %622 = vmatprep.subr.mxu0 0.0
        %623 = vmatpush1.msra.mxu0 %v513
        %624 = vmatprep.subr.mxu0 0.0
        %625 = vmatpush1.msra.mxu0 %v514
        %626 = vmatprep.subr.mxu0 0.0
        %627 = vmatpush1.msra.mxu0 %v515
        %628 = vmatprep.subr.mxu0 0.0
        %629 = vmatpush1.msra.mxu0 %v516
        %630 = vmatprep.subr.mxu0 0.0
        %631 = vmatpush1.msra.mxu0 %v517
        %632 = vmatprep.subr.mxu0 0.0
        %633 = vmatpush1.msra.mxu0 %v518
        %634 = vmatprep.subr.mxu0 0.0
        %635 = vmatpush1.msra.mxu0 %v519
        %636 = vmatprep.subr.mxu0 0.0
        %637 = vmatpush1.msra.mxu0 %v520
        %638 = vmatprep.subr.mxu0 0.0
        %639 = vmatpush1.msra.mxu0 %v521
        %640 = vmatprep.subr.mxu0 0.0
        %641 = vmatpush1.msra.mxu0 %v522
        %642 = vmatprep.subr.mxu0 0.0
        %643 = vmatpush1.msra.mxu0 %v523
        %644 = vmatprep.subr.mxu0 0.0
        %645 = vmatpush1.msra.mxu0 %v524
        %646 = vmatprep.subr.mxu0 0.0
        %647 = vmatpush1.msra.mxu0 %v525
        %648 = vmatprep.subr.mxu0 0.0
        %649 = vmatpush1.msra.mxu0 %v526
        %650 = vmatprep.subr.mxu0 0.0
        %651 = vmatpush1.msra.mxu0 %v527
        %652 = vmatprep.subr.mxu0 0.0
        %653 = vmatpush1.msra.mxu0 %v528
        %654 = vmatprep.subr.mxu0 0.0
        %655 = vmatpush1.msra.mxu0 %v529
        %656 = vmatprep.subr.mxu0 0.0
        %657 = vmatpush1.msra.mxu0 %v530
        %658 = vmatprep.subr.mxu0 0.0
        %659 = vmatpush1.msra.mxu0 %v531
        %660 = vmatprep.mubr.f32.mxu0 %v372
        %661 = vmatmul.mubr.f32.gmra.mrb[0].mxu0 %v371
        %v662 = vpop.f32.mrb[0].mxu0
        %v663 = vadd.f32 0.0, %v662
        %v664 = vpop.f32.mrb[0].mxu0
        %665 = vmatprep.mubr.f32.mxu0 %v376
        %666 = vmatmul.mubr.f32.gmra.mrb[0].mxu0 %v375
        %v667 = vpop.f32.mrb[0].mxu0
        %v668 = vadd.f32 0.0, %v667
        %v669 = vpop.f32.mrb[0].mxu0
        %670 = vmatprep.mubr.f32.mxu0 %v380
        %671 = vmatmul.mubr.f32.gmra.mrb[0].mxu0 %v379
        %v672 = vpop.f32.mrb[0].mxu0
        %v673 = vadd.f32 0.0, %v672
        %v674 = vpop.f32.mrb[0].mxu0
        %675 = vmatprep.mubr.f32.mxu0 %v384
        %676 = vmatmul.mubr.f32.gmra.mrb[0].mxu0 %v383
        %v677 = vpop.f32.mrb[0].mxu0
        %v678 = vadd.f32 0.0, %v677
        %v679 = vpop.f32.mrb[0].mxu0
        %680 = vmatprep.mubr.f32.mxu0 %v388
        %681 = vmatmul.mubr.f32.gmra.mrb[0].mxu0 %v387
        %v682 = vpop.f32.mrb[0].mxu0
        %v683 = vadd.f32 0.0, %v682
        %v684 = vpop.f32.mrb[0].mxu0
        %685 = vmatprep.mubr.f32.mxu0 %v392
        %686 = vmatmul.mubr.f32.gmra.mrb[0].mxu0 %v391
        %v687 = vpop.f32.mrb[0].mxu0
        %v688 = vadd.f32 0.0, %v687
        %v689 = vpop.f32.mrb[0].mxu0
        %690 = vmatprep.mubr.f32.mxu0 %v396
        %691 = vmatmul.mubr.f32.gmra.mrb[0].mxu0 %v395
        %v692 = vpop.f32.mrb[0].mxu0
        %v693 = vadd.f32 0.0, %v692
        %v694 = vpop.f32.mrb[0].mxu0
        %695 = vmatprep.mubr.f32.mxu0 %v400
        %696 = vmatmul.mubr.f32.gmra.mrb[0].mxu0 %v399
        %v697 = vpop.f32.mrb[0].mxu0
        %v698 = vadd.f32 0.0, %v697
        %v699 = vpop.f32.mrb[0].mxu0
        %700 = vmatprep.mubr.f32.mxu0 %v404
        %701 = vmatmul.mubr.f32.gmra.mrb[0].mxu0 %v403
        %v702 = vpop.f32.mrb[0].mxu0
        %v703 = vadd.f32 0.0, %v702
        %v704 = vpop.f32.mrb[0].mxu0
        %705 = vmatprep.mubr.f32.mxu0 %v408
        %706 = vmatmul.mubr.f32.gmra.mrb[0].mxu0 %v407
        %v707 = vpop.f32.mrb[0].mxu0
        %v708 = vadd.f32 0.0, %v707
        %v709 = vpop.f32.mrb[0].mxu0
        %710 = vmatprep.mubr.f32.mxu0 %v412
        %711 = vmatmul.mubr.f32.gmra.mrb[0].mxu0 %v411
        %v712 = vpop.f32.mrb[0].mxu0
        %v713 = vadd.f32 0.0, %v712
        %v714 = vpop.f32.mrb[0].mxu0
        %715 = vmatprep.mubr.f32.mxu0 %v416
        %716 = vmatmul.mubr.f32.gmra.mrb[0].mxu0 %v415
        %v717 = vpop.f32.mrb[0].mxu0
        %v718 = vadd.f32 0.0, %v717
        %v719 = vpop.f32.mrb[0].mxu0
        %720 = vmatprep.mubr.f32.mxu0 %v420
        %721 = vmatmul.mubr.f32.gmra.mrb[0].mxu0 %v419
        %v722 = vpop.f32.mrb[0].mxu0
        %v723 = vadd.f32 0.0, %v722
        %v724 = vpop.f32.mrb[0].mxu0
        %725 = vmatprep.mubr.f32.mxu0 %v424
        %726 = vmatmul.mubr.f32.gmra.mrb[0].mxu0 %v423
        %v727 = vpop.f32.mrb[0].mxu0
        %v728 = vadd.f32 0.0, %v727
        %v729 = vpop.f32.mrb[0].mxu0
        %730 = vmatprep.mubr.f32.mxu0 %v428
        %731 = vmatmul.mubr.f32.gmra.mrb[0].mxu0 %v427
        %v732 = vpop.f32.mrb[0].mxu0
        %v733 = vadd.f32 0.0, %v732
        %v734 = vpop.f32.mrb[0].mxu0
        %735 = vmatprep.mubr.f32.mxu0 %v432
        %736 = vmatmul.mubr.f32.gmra.mrb[0].mxu0 %v431
        %v737 = vpop.f32.mrb[0].mxu0
        %v738 = vadd.f32 0.0, %v737
        %v739 = vpop.f32.mrb[0].mxu0
        %740 = vmatprep.mubr.f32.mxu0 %v436
        %741 = vmatmul.mubr.f32.gmra.mrb[0].mxu0 %v435
        %v742 = vpop.f32.mrb[0].mxu0
        %v743 = vadd.f32 0.0, %v742
        %v744 = vpop.f32.mrb[0].mxu0
        %745 = vmatprep.mubr.f32.mxu0 %v440
        %746 = vmatmul.mubr.f32.gmra.mrb[0].mxu0 %v439
        %v747 = vpop.f32.mrb[0].mxu0
        %v748 = vadd.f32 0.0, %v747
        %v749 = vpop.f32.mrb[0].mxu0
        %750 = vmatprep.mubr.f32.mxu0 %v444
        %751 = vmatmul.mubr.f32.gmra.mrb[0].mxu0 %v443
        %v752 = vpop.f32.mrb[0].mxu0
        %v753 = vadd.f32 0.0, %v752
        %v754 = vpop.f32.mrb[0].mxu0
        %755 = vmatprep.mubr.f32.mxu0 %v448
        %756 = vmatmul.mubr.f32.gmra.mrb[0].mxu0 %v447
        %v757 = vpop.f32.mrb[0].mxu0
        %v758 = vadd.f32 0.0, %v757
        %v759 = vpop.f32.mrb[0].mxu0
        %760 = vmatprep.mubr.f32.mxu0 %v452
        %761 = vmatmul.mubr.f32.gmra.mrb[0].mxu0 %v451
        %v762 = vpop.f32.mrb[0].mxu0
        %v763 = vadd.f32 0.0, %v762
        %v764 = vpop.f32.mrb[0].mxu0
        %765 = vmatprep.mubr.f32.mxu0 %v456
        %766 = vmatmul.mubr.f32.gmra.mrb[0].mxu0 %v455
        %v767 = vpop.f32.mrb[0].mxu0
        %v768 = vadd.f32 0.0, %v767
        %v769 = vpop.f32.mrb[0].mxu0
        %770 = vmatprep.mubr.f32.mxu0 %v460
        %771 = vmatmul.mubr.f32.gmra.mrb[0].mxu0 %v459
        %v772 = vpop.f32.mrb[0].mxu0
        %v773 = vadd.f32 0.0, %v772
        %v774 = vpop.f32.mrb[0].mxu0
        %775 = vmatprep.mubr.f32.mxu0 %v464
        %776 = vmatmul.mubr.f32.gmra.mrb[0].mxu0 %v463
        %v777 = vpop.f32.mrb[0].mxu0
        %v778 = vadd.f32 0.0, %v777
        %v779 = vpop.f32.mrb[0].mxu0
        %780 = vmatprep.mubr.f32.mxu0 %v468
        %781 = vmatmul.mubr.f32.gmra.mrb[0].mxu0 %v467
        %v782 = vpop.f32.mrb[0].mxu0
        %v783 = vadd.f32 0.0, %v782
        %v784 = vpop.f32.mrb[0].mxu0
        %785 = vmatprep.mubr.f32.mxu0 %v472
        %786 = vmatmul.mubr.f32.gmra.mrb[0].mxu0 %v471
        %v787 = vpop.f32.mrb[0].mxu0
        %v788 = vadd.f32 0.0, %v787
        %v789 = vpop.f32.mrb[0].mxu0
        %790 = vmatprep.mubr.f32.mxu0 %v476
        %791 = vmatmul.mubr.f32.gmra.mrb[0].mxu0 %v475
        %v792 = vpop.f32.mrb[0].mxu0
        %v793 = vadd.f32 0.0, %v792
        %v794 = vpop.f32.mrb[0].mxu0
        %795 = vmatprep.mubr.f32.mxu0 %v480
        %796 = vmatmul.mubr.f32.gmra.mrb[0].mxu0 %v479
        %v797 = vpop.f32.mrb[0].mxu0
        %v798 = vadd.f32 0.0, %v797
        %v799 = vpop.f32.mrb[0].mxu0
        %800 = vmatprep.mubr.f32.mxu0 %v484
        %801 = vmatmul.mubr.f32.gmra.mrb[0].mxu0 %v483
        %v802 = vpop.f32.mrb[0].mxu0
        %v803 = vadd.f32 0.0, %v802
        %v804 = vpop.f32.mrb[0].mxu0
        %805 = vmatprep.mubr.f32.mxu0 %v488
        %806 = vmatmul.mubr.f32.gmra.mrb[0].mxu0 %v487
        %v807 = vpop.f32.mrb[0].mxu0
        %v808 = vadd.f32 0.0, %v807
        %v809 = vpop.f32.mrb[0].mxu0
        %810 = vmatprep.mubr.f32.mxu0 %v492
        %811 = vmatmul.mubr.f32.gmra.mrb[0].mxu0 %v491
        %v812 = vpop.f32.mrb[0].mxu0
        %v813 = vadd.f32 0.0, %v812
        %v814 = vpop.f32.mrb[0].mxu0
        %815 = vmatprep.mubr.f32.mxu0 %v496
        %816 = vmatmul.mubr.f32.gmra.mrb[0].mxu0 %v495
        %v817 = vpop.f32.mrb[0].mxu0
        %v818 = vadd.f32 0.0, %v817
        %v819 = vpop.f32.mrb[0].mxu0
        %820 = vdwg.mxu0
        %821 = vmatprep.subr.mxu0 0.0
        %822 = vmatpush1.msra.mxu0 %v532
        %823 = vmatprep.subr.mxu0 0.0
        %824 = vmatpush1.msra.mxu0 %v533
        %825 = vmatprep.subr.mxu0 0.0
        %826 = vmatpush1.msra.mxu0 %v534
        %827 = vmatprep.subr.mxu0 0.0
        %828 = vmatpush1.msra.mxu0 %v535
        %829 = vmatprep.subr.mxu0 0.0
        %830 = vmatpush1.msra.mxu0 %v536
        %831 = vmatprep.subr.mxu0 0.0
        %832 = vmatpush1.msra.mxu0 %v537
        %833 = vmatprep.subr.mxu0 0.0
        %834 = vmatpush1.msra.mxu0 %v538
        %835 = vmatprep.subr.mxu0 0.0
        %836 = vmatpush1.msra.mxu0 %v539
        %837 = vmatprep.subr.mxu0 0.0
        %838 = vmatpush1.msra.mxu0 %v540
        %839 = vmatprep.subr.mxu0 0.0
        %840 = vmatpush1.msra.mxu0 %v541
        %841 = vmatprep.subr.mxu0 0.0
        %842 = vmatpush1.msra.mxu0 %v542
        %843 = vmatprep.subr.mxu0 0.0
        %844 = vmatpush1.msra.mxu0 %v543
        %845 = vmatprep.subr.mxu0 0.0
        %846 = vmatpush1.msra.mxu0 %v544
        %847 = vmatprep.subr.mxu0 0.0
        %848 = vmatpush1.msra.mxu0 %v545
        %849 = vmatprep.subr.mxu0 0.0
        %850 = vmatpush1.msra.mxu0 %v546
        %851 = vmatprep.subr.mxu0 0.0
        %852 = vmatpush1.msra.mxu0 %v547
        %853 = vmatprep.subr.mxu0 0.0
        %854 = vmatpush1.msra.mxu0 %v548
        %855 = vmatprep.subr.mxu0 0.0
        %856 = vmatpush1.msra.mxu0 %v549
        %857 = vmatprep.subr.mxu0 0.0
        %858 = vmatpush1.msra.mxu0 %v550
        %859 = vmatprep.subr.mxu0 0.0
        %860 = vmatpush1.msra.mxu0 %v551
        %861 = vmatprep.subr.mxu0 0.0
        %862 = vmatpush1.msra.mxu0 %v552
        %863 = vmatprep.subr.mxu0 0.0
        %864 = vmatpush1.msra.mxu0 %v553
        %865 = vmatprep.subr.mxu0 0.0
        %866 = vmatpush1.msra.mxu0 %v554
        %867 = vmatprep.subr.mxu0 0.0
        %868 = vmatpush1.msra.mxu0 %v555
        %869 = vmatprep.subr.mxu0 0.0
        %870 = vmatpush1.msra.mxu0 %v556
        %871 = vmatprep.subr.mxu0 0.0
        %872 = vmatpush1.msra.mxu0 %v557
        %873 = vmatprep.subr.mxu0 0.0
        %874 = vmatpush1.msra.mxu0 %v558
        %875 = vmatprep.subr.mxu0 0.0
        %876 = vmatpush1.msra.mxu0 %v559
        %877 = vmatprep.subr.mxu0 0.0
        %878 = vmatpush1.msra.mxu0 %v560
        %879 = vmatprep.subr.mxu0 0.0
        %880 = vmatpush1.msra.mxu0 %v561
        %881 = vmatprep.subr.mxu0 0.0
        %882 = vmatpush1.msra.mxu0 %v562
        %883 = vmatprep.subr.mxu0 0.0
        %884 = vmatpush1.msra.mxu0 %v563
        %885 = vmatprep.mubr.f32.mxu0 %v374
        %886 = vmatmul.mubr.f32.gmra.mrb[0].mxu0 %v373
        %v887 = vpop.f32.mrb[0].mxu0
        %v888 = vadd.f32 %v663, %v887
        %v889 = vpop.f32.mrb[0].mxu0
        %890 = vmatprep.mubr.f32.mxu0 %v378
        %891 = vmatmul.mubr.f32.gmra.mrb[0].mxu0 %v377
        %v892 = vpop.f32.mrb[0].mxu0
        %v893 = vadd.f32 %v668, %v892
        %v894 = vpop.f32.mrb[0].mxu0
        %895 = vmatprep.mubr.f32.mxu0 %v382
        %896 = vmatmul.mubr.f32.gmra.mrb[0].mxu0 %v381
        %v897 = vpop.f32.mrb[0].mxu0
        %v898 = vadd.f32 %v673, %v897
        %v899 = vpop.f32.mrb[0].mxu0
        %900 = vmatprep.mubr.f32.mxu0 %v386
        %901 = vmatmul.mubr.f32.gmra.mrb[0].mxu0 %v385
        %v902 = vpop.f32.mrb[0].mxu0
        %v903 = vadd.f32 %v678, %v902
        %v904 = vpop.f32.mrb[0].mxu0
        %905 = vmatprep.mubr.f32.mxu0 %v390
        %906 = vmatmul.mubr.f32.gmra.mrb[0].mxu0 %v389
        %v907 = vpop.f32.mrb[0].mxu0
        %v908 = vadd.f32 %v683, %v907
        %v909 = vpop.f32.mrb[0].mxu0
        %910 = vmatprep.mubr.f32.mxu0 %v394
        %911 = vmatmul.mubr.f32.gmra.mrb[0].mxu0 %v393
        %v912 = vpop.f32.mrb[0].mxu0
        %v913 = vadd.f32 %v688, %v912
        %v914 = vpop.f32.mrb[0].mxu0
        %915 = vmatprep.mubr.f32.mxu0 %v398
        %916 = vmatmul.mubr.f32.gmra.mrb[0].mxu0 %v397
        %v917 = vpop.f32.mrb[0].mxu0
        %v918 = vadd.f32 %v693, %v917
        %v919 = vpop.f32.mrb[0].mxu0
        %920 = vmatprep.mubr.f32.mxu0 %v402
        %921 = vmatmul.mubr.f32.gmra.mrb[0].mxu0 %v401
        %v922 = vpop.f32.mrb[0].mxu0
        %v923 = vadd.f32 %v698, %v922
        %v924 = vpop.f32.mrb[0].mxu0
        %925 = vmatprep.mubr.f32.mxu0 %v406
        %926 = vmatmul.mubr.f32.gmra.mrb[0].mxu0 %v405
        %v927 = vpop.f32.mrb[0].mxu0
        %v928 = vadd.f32 %v703, %v927
        %v929 = vpop.f32.mrb[0].mxu0
        %930 = vmatprep.mubr.f32.mxu0 %v410
        %931 = vmatmul.mubr.f32.gmra.mrb[0].mxu0 %v409
        %v932 = vpop.f32.mrb[0].mxu0
        %v933 = vadd.f32 %v708, %v932
        %v934 = vpop.f32.mrb[0].mxu0
        %935 = vmatprep.mubr.f32.mxu0 %v414
        %936 = vmatmul.mubr.f32.gmra.mrb[0].mxu0 %v413
        %v937 = vpop.f32.mrb[0].mxu0
        %v938 = vadd.f32 %v713, %v937
        %v939 = vpop.f32.mrb[0].mxu0
        %940 = vmatprep.mubr.f32.mxu0 %v418
        %941 = vmatmul.mubr.f32.gmra.mrb[0].mxu0 %v417
        %v942 = vpop.f32.mrb[0].mxu0
        %v943 = vadd.f32 %v718, %v942
        %v944 = vpop.f32.mrb[0].mxu0
        %945 = vmatprep.mubr.f32.mxu0 %v422
        %946 = vmatmul.mubr.f32.gmra.mrb[0].mxu0 %v421
        %v947 = vpop.f32.mrb[0].mxu0
        %v948 = vadd.f32 %v723, %v947
        %v949 = vpop.f32.mrb[0].mxu0
        %950 = vmatprep.mubr.f32.mxu0 %v426
        %951 = vmatmul.mubr.f32.gmra.mrb[0].mxu0 %v425
        %v952 = vpop.f32.mrb[0].mxu0
        %v953 = vadd.f32 %v728, %v952
        %v954 = vpop.f32.mrb[0].mxu0
        %955 = vmatprep.mubr.f32.mxu0 %v430
        %956 = vmatmul.mubr.f32.gmra.mrb[0].mxu0 %v429
        %v957 = vpop.f32.mrb[0].mxu0
        %v958 = vadd.f32 %v733, %v957
        %v959 = vpop.f32.mrb[0].mxu0
        %960 = vmatprep.mubr.f32.mxu0 %v434
        %961 = vmatmul.mubr.f32.gmra.mrb[0].mxu0 %v433
        %v962 = vpop.f32.mrb[0].mxu0
        %v963 = vadd.f32 %v738, %v962
        %v964 = vpop.f32.mrb[0].mxu0
        %965 = vmatprep.mubr.f32.mxu0 %v438
        %966 = vmatmul.mubr.f32.gmra.mrb[0].mxu0 %v437
        %v967 = vpop.f32.mrb[0].mxu0
        %v968 = vadd.f32 %v743, %v967
        %v969 = vpop.f32.mrb[0].mxu0
        %970 = vmatprep.mubr.f32.mxu0 %v442
        %971 = vmatmul.mubr.f32.gmra.mrb[0].mxu0 %v441
        %v972 = vpop.f32.mrb[0].mxu0
        %v973 = vadd.f32 %v748, %v972
        %v974 = vpop.f32.mrb[0].mxu0
        %975 = vmatprep.mubr.f32.mxu0 %v446
        %976 = vmatmul.mubr.f32.gmra.mrb[0].mxu0 %v445
        %v977 = vpop.f32.mrb[0].mxu0
        %v978 = vadd.f32 %v753, %v977
        %v979 = vpop.f32.mrb[0].mxu0
        %980 = vmatprep.mubr.f32.mxu0 %v450
        %981 = vmatmul.mubr.f32.gmra.mrb[0].mxu0 %v449
        %v982 = vpop.f32.mrb[0].mxu0
        %v983 = vadd.f32 %v758, %v982
        %v984 = vpop.f32.mrb[0].mxu0
        %985 = vmatprep.mubr.f32.mxu0 %v454
        %986 = vmatmul.mubr.f32.gmra.mrb[0].mxu0 %v453
        %v987 = vpop.f32.mrb[0].mxu0
        %v988 = vadd.f32 %v763, %v987
        %v989 = vpop.f32.mrb[0].mxu0
        %990 = vmatprep.mubr.f32.mxu0 %v458
        %991 = vmatmul.mubr.f32.gmra.mrb[0].mxu0 %v457
        %v992 = vpop.f32.mrb[0].mxu0
        %v993 = vadd.f32 %v768, %v992
        %v994 = vpop.f32.mrb[0].mxu0
        %995 = vmatprep.mubr.f32.mxu0 %v462
        %996 = vmatmul.mubr.f32.gmra.mrb[0].mxu0 %v461
        %v997 = vpop.f32.mrb[0].mxu0
        %v998 = vadd.f32 %v773, %v997
        %v999 = vpop.f32.mrb[0].mxu0
        %1000 = vmatprep.mubr.f32.mxu0 %v466
        %1001 = vmatmul.mubr.f32.gmra.mrb[0].mxu0 %v465
        %v1002 = vpop.f32.mrb[0].mxu0
        %v1003 = vadd.f32 %v778, %v1002
        %v1004 = vpop.f32.mrb[0].mxu0
        %1005 = vmatprep.mubr.f32.mxu0 %v470
        %1006 = vmatmul.mubr.f32.gmra.mrb[0].mxu0 %v469
        %v1007 = vpop.f32.mrb[0].mxu0
        %v1008 = vadd.f32 %v783, %v1007
        %v1009 = vpop.f32.mrb[0].mxu0
        %1010 = vmatprep.mubr.f32.mxu0 %v474
        %1011 = vmatmul.mubr.f32.gmra.mrb[0].mxu0 %v473
        %v1012 = vpop.f32.mrb[0].mxu0
        %v1013 = vadd.f32 %v788, %v1012
        %v1014 = vpop.f32.mrb[0].mxu0
        %1015 = vmatprep.mubr.f32.mxu0 %v478
        %1016 = vmatmul.mubr.f32.gmra.mrb[0].mxu0 %v477
        %v1017 = vpop.f32.mrb[0].mxu0
        %v1018 = vadd.f32 %v793, %v1017
        %v1019 = vpop.f32.mrb[0].mxu0
        %1020 = vmatprep.mubr.f32.mxu0 %v482
        %1021 = vmatmul.mubr.f32.gmra.mrb[0].mxu0 %v481
        %v1022 = vpop.f32.mrb[0].mxu0
        %v1023 = vadd.f32 %v798, %v1022
        %v1024 = vpop.f32.mrb[0].mxu0
        %1025 = vmatprep.mubr.f32.mxu0 %v486
        %1026 = vmatmul.mubr.f32.gmra.mrb[0].mxu0 %v485
        %v1027 = vpop.f32.mrb[0].mxu0
        %v1028 = vadd.f32 %v803, %v1027
        %v1029 = vpop.f32.mrb[0].mxu0
        %1030 = vmatprep.mubr.f32.mxu0 %v490
        %1031 = vmatmul.mubr.f32.gmra.mrb[0].mxu0 %v489
        %v1032 = vpop.f32.mrb[0].mxu0
        %v1033 = vadd.f32 %v808, %v1032
        %v1034 = vpop.f32.mrb[0].mxu0
        %1035 = vmatprep.mubr.f32.mxu0 %v494
        %1036 = vmatmul.mubr.f32.gmra.mrb[0].mxu0 %v493
        %v1037 = vpop.f32.mrb[0].mxu0
        %v1038 = vadd.f32 %v813, %v1037
        %v1039 = vpop.f32.mrb[0].mxu0
        %1040 = vmatprep.mubr.f32.mxu0 %v498
        %1041 = vmatmul.mubr.f32.gmra.mrb[0].mxu0 %v497
        %v1042 = vpop.f32.mrb[0].mxu0
        %v1043 = vadd.f32 %v818, %v1042
        %v1044 = vpop.f32.mrb[0].mxu0
        %1045 = vdwg.mxu0
        %v1046 = vadd.f32 %v564, %v888
        %v1047 = vadd.f32 %v565, %v893
        %v1048 = vadd.f32 %v566, %v898
        %v1049 = vadd.f32 %v567, %v903
        %v1050 = vadd.f32 %v568, %v908
        %v1051 = vadd.f32 %v569, %v913
        %v1052 = vadd.f32 %v570, %v918
        %v1053 = vadd.f32 %v571, %v923
        %v1054 = vadd.f32 %v572, %v928
        %v1055 = vadd.f32 %v573, %v933
        %v1056 = vadd.f32 %v574, %v938
        %v1057 = vadd.f32 %v575, %v943
        %v1058 = vadd.f32 %v576, %v948
        %v1059 = vadd.f32 %v577, %v953
        %v1060 = vadd.f32 %v578, %v958
        %v1061 = vadd.f32 %v579, %v963
        %v1062 = vadd.f32 %v580, %v968
        %v1063 = vadd.f32 %v581, %v973
        %v1064 = vadd.f32 %v582, %v978
        %v1065 = vadd.f32 %v583, %v983
        %v1066 = vadd.f32 %v584, %v988
        %v1067 = vadd.f32 %v585, %v993
        %v1068 = vadd.f32 %v586, %v998
        %v1069 = vadd.f32 %v587, %v1003
        %v1070 = vadd.f32 %v588, %v1008
        %v1071 = vadd.f32 %v589, %v1013
        %v1072 = vadd.f32 %v590, %v1018
        %v1073 = vadd.f32 %v591, %v1023
        %v1074 = vadd.f32 %v592, %v1028
        %v1075 = vadd.f32 %v593, %v1033
        %v1076 = vadd.f32 %v594, %v1038
        %v1077 = vadd.f32 %v595, %v1043
        %1078 = vst [vmem:[#allocation2] sm:$0xff] %v1046
        %1079 = vst [vmem:[#allocation2 + $0x8] sm:$0xff] %v1047
        %1080 = vst [vmem:[#allocation2 + $0x10] sm:$0xff] %v1048
        %1081 = vst [vmem:[#allocation2 + $0x18] sm:$0xff] %v1049
        %1082 = vst [vmem:[#allocation2 + $0x20] sm:$0xff] %v1050
        %1083 = vst [vmem:[#allocation2 + $0x28] sm:$0xff] %v1051
        %1084 = vst [vmem:[#allocation2 + $0x30] sm:$0xff] %v1052
        %1085 = vst [vmem:[#allocation2 + $0x38] sm:$0xff] %v1053
        %1086 = vst [vmem:[#allocation2 + $0x40] sm:$0xff] %v1054
        %1087 = vst [vmem:[#allocation2 + $0x48] sm:$0xff] %v1055
        %1088 = vst [vmem:[#allocation2 + $0x50] sm:$0xff] %v1056
        %1089 = vst [vmem:[#allocation2 + $0x58] sm:$0xff] %v1057
        %1090 = vst [vmem:[#allocation2 + $0x60] sm:$0xff] %v1058
        %1091 = vst [vmem:[#allocation2 + $0x68] sm:$0xff] %v1059
        %1092 = vst [vmem:[#allocation2 + $0x70] sm:$0xff] %v1060
        %1093 = vst [vmem:[#allocation2 + $0x78] sm:$0xff] %v1061
        %1094 = vst [vmem:[#allocation2 + $0x80] sm:$0xff] %v1062
        %1095 = vst [vmem:[#allocation2 + $0x88] sm:$0xff] %v1063
        %1096 = vst [vmem:[#allocation2 + $0x90] sm:$0xff] %v1064
        %1097 = vst [vmem:[#allocation2 + $0x98] sm:$0xff] %v1065
        %1098 = vst [vmem:[#allocation2 + $0xa0] sm:$0xff] %v1066
        %1099 = vst [vmem:[#allocation2 + $0xa8] sm:$0xff] %v1067
        %1100 = vst [vmem:[#allocation2 + $0xb0] sm:$0xff] %v1068
        %1101 = vst [vmem:[#allocation2 + $0xb8] sm:$0xff] %v1069
        %1102 = vst [vmem:[#allocation2 + $0xc0] sm:$0xff] %v1070
        %1103 = vst [vmem:[#allocation2 + $0xc8] sm:$0xff] %v1071
        %1104 = vst [vmem:[#allocation2 + $0xd0] sm:$0xff] %v1072
        %1105 = vst [vmem:[#allocation2 + $0xd8] sm:$0xff] %v1073
        %1106 = vst [vmem:[#allocation2 + $0xe0] sm:$0xff] %v1074
        %1107 = vst [vmem:[#allocation2 + $0xe8] sm:$0xff] %v1075
        %1108 = vst [vmem:[#allocation2 + $0xf0] sm:$0xff] %v1076
        %1109 = vst [vmem:[#allocation2 + $0xf8] sm:$0xff] %v1077
        // Predicated region
        $region65: #{aggregator_forward.1} parent=43 // pred_check
          %p1110 = pneg %p334
        $region66: #{aggregator_forward.1} parent=43 // pred_check_branch
          %1112 = sbr.rel (%p1110) target = $region68
        $region67: #{aggregator_forward.1} parent=43 // pred_region
          %s1113 = smul.u32 %s29, 256
          %s1114 = scalar_lea.vmem [#allocation6], %s1113
          %v1115 = vld [vmem:[%s1114] sm:$0xff]
          %v1116 = vld [vmem:[%s1114 + $0x8] sm:$0xff]
          %v1117 = vld [vmem:[%s1114 + $0x10] sm:$0xff]
          %v1118 = vld [vmem:[%s1114 + $0x18] sm:$0xff]
          %v1119 = vld [vmem:[%s1114 + $0x20] sm:$0xff]
          %v1120 = vld [vmem:[%s1114 + $0x28] sm:$0xff]
          %v1121 = vld [vmem:[%s1114 + $0x30] sm:$0xff]
          %v1122 = vld [vmem:[%s1114 + $0x38] sm:$0xff]
          %v1123 = vld [vmem:[%s1114 + $0x40] sm:$0xff]
          %v1124 = vld [vmem:[%s1114 + $0x48] sm:$0xff]
          %v1125 = vld [vmem:[%s1114 + $0x50] sm:$0xff]
          %v1126 = vld [vmem:[%s1114 + $0x58] sm:$0xff]
          %v1127 = vld [vmem:[%s1114 + $0x60] sm:$0xff]
          %v1128 = vld [vmem:[%s1114 + $0x68] sm:$0xff]
          %v1129 = vld [vmem:[%s1114 + $0x70] sm:$0xff]
          %v1130 = vld [vmem:[%s1114 + $0x78] sm:$0xff]
          %v1131 = vld [vmem:[%s1114 + $0x80] sm:$0xff]
          %v1132 = vld [vmem:[%s1114 + $0x88] sm:$0xff]
          %v1133 = vld [vmem:[%s1114 + $0x90] sm:$0xff]
          %v1134 = vld [vmem:[%s1114 + $0x98] sm:$0xff]
          %v1135 = vld [vmem:[%s1114 + $0xa0] sm:$0xff]
          %v1136 = vld [vmem:[%s1114 + $0xa8] sm:$0xff]
          %v1137 = vld [vmem:[%s1114 + $0xb0] sm:$0xff]
          %v1138 = vld [vmem:[%s1114 + $0xb8] sm:$0xff]
          %v1139 = vld [vmem:[%s1114 + $0xc0] sm:$0xff]
          %v1140 = vld [vmem:[%s1114 + $0xc8] sm:$0xff]
          %v1141 = vld [vmem:[%s1114 + $0xd0] sm:$0xff]
          %v1142 = vld [vmem:[%s1114 + $0xd8] sm:$0xff]
          %v1143 = vld [vmem:[%s1114 + $0xe0] sm:$0xff]
          %v1144 = vld [vmem:[%s1114 + $0xe8] sm:$0xff]
          %v1145 = vld [vmem:[%s1114 + $0xf0] sm:$0xff]
          %v1146 = vld [vmem:[%s1114 + $0xf8] sm:$0xff]
          %v1147 = vld [vmem:[#allocation2] sm:$0xff]
          %v1148 = vld [vmem:[#allocation2 + $0x8] sm:$0xff]
          %v1149 = vld [vmem:[#allocation2 + $0x10] sm:$0xff]
          %v1150 = vld [vmem:[#allocation2 + $0x18] sm:$0xff]
          %v1151 = vld [vmem:[#allocation2 + $0x20] sm:$0xff]
          %v1152 = vld [vmem:[#allocation2 + $0x28] sm:$0xff]
          %v1153 = vld [vmem:[#allocation2 + $0x30] sm:$0xff]
          %v1154 = vld [vmem:[#allocation2 + $0x38] sm:$0xff]
          %v1155 = vld [vmem:[#allocation2 + $0x40] sm:$0xff]
          %v1156 = vld [vmem:[#allocation2 + $0x48] sm:$0xff]
          %v1157 = vld [vmem:[#allocation2 + $0x50] sm:$0xff]
          %v1158 = vld [vmem:[#allocation2 + $0x58] sm:$0xff]
          %v1159 = vld [vmem:[#allocation2 + $0x60] sm:$0xff]
          %v1160 = vld [vmem:[#allocation2 + $0x68] sm:$0xff]
          %v1161 = vld [vmem:[#allocation2 + $0x70] sm:$0xff]
          %v1162 = vld [vmem:[#allocation2 + $0x78] sm:$0xff]
          %v1163 = vld [vmem:[#allocation2 + $0x80] sm:$0xff]
          %v1164 = vld [vmem:[#allocation2 + $0x88] sm:$0xff]
          %v1165 = vld [vmem:[#allocation2 + $0x90] sm:$0xff]
          %v1166 = vld [vmem:[#allocation2 + $0x98] sm:$0xff]
          %v1167 = vld [vmem:[#allocation2 + $0xa0] sm:$0xff]
          %v1168 = vld [vmem:[#allocation2 + $0xa8] sm:$0xff]
          %v1169 = vld [vmem:[#allocation2 + $0xb0] sm:$0xff]
          %v1170 = vld [vmem:[#allocation2 + $0xb8] sm:$0xff]
          %v1171 = vld [vmem:[#allocation2 + $0xc0] sm:$0xff]
          %v1172 = vld [vmem:[#allocation2 + $0xc8] sm:$0xff]
          %v1173 = vld [vmem:[#allocation2 + $0xd0] sm:$0xff]
          %v1174 = vld [vmem:[#allocation2 + $0xd8] sm:$0xff]
          %v1175 = vld [vmem:[#allocation2 + $0xe0] sm:$0xff]
          %v1176 = vld [vmem:[#allocation2 + $0xe8] sm:$0xff]
          %v1177 = vld [vmem:[#allocation2 + $0xf0] sm:$0xff]
          %v1178 = vld [vmem:[#allocation2 + $0xf8] sm:$0xff]
          %v1179 = vadd.f32 %v1115, %v1147
          %v1180 = vadd.f32 %v1116, %v1148
          %v1181 = vadd.f32 %v1117, %v1149
          %v1182 = vadd.f32 %v1118, %v1150
          %v1183 = vadd.f32 %v1119, %v1151
          %v1184 = vadd.f32 %v1120, %v1152
          %v1185 = vadd.f32 %v1121, %v1153
          %v1186 = vadd.f32 %v1122, %v1154
          %v1187 = vadd.f32 %v1123, %v1155
          %v1188 = vadd.f32 %v1124, %v1156
          %v1189 = vadd.f32 %v1125, %v1157
          %v1190 = vadd.f32 %v1126, %v1158
          %v1191 = vadd.f32 %v1127, %v1159
          %v1192 = vadd.f32 %v1128, %v1160
          %v1193 = vadd.f32 %v1129, %v1161
          %v1194 = vadd.f32 %v1130, %v1162
          %v1195 = vadd.f32 %v1131, %v1163
          %v1196 = vadd.f32 %v1132, %v1164
          %v1197 = vadd.f32 %v1133, %v1165
          %v1198 = vadd.f32 %v1134, %v1166
          %v1199 = vadd.f32 %v1135, %v1167
          %v1200 = vadd.f32 %v1136, %v1168
          %v1201 = vadd.f32 %v1137, %v1169
          %v1202 = vadd.f32 %v1138, %v1170
          %v1203 = vadd.f32 %v1139, %v1171
          %v1204 = vadd.f32 %v1140, %v1172
          %v1205 = vadd.f32 %v1141, %v1173
          %v1206 = vadd.f32 %v1142, %v1174
          %v1207 = vadd.f32 %v1143, %v1175
          %v1208 = vadd.f32 %v1144, %v1176
          %v1209 = vadd.f32 %v1145, %v1177
          %v1210 = vadd.f32 %v1146, %v1178
          %v1211 = vld [vmem:[#allocation8] sm:$0xff]
          %v1212 = vld [vmem:[#allocation8 + $0x8] sm:$0xff]
          %v1213 = vld [vmem:[#allocation8 + $0x10] sm:$0xff]
          %v1214 = vld [vmem:[#allocation8 + $0x18] sm:$0xff]
          %v1215 = vld [vmem:[#allocation8 + $0x20] sm:$0xff]
          %v1216 = vld [vmem:[#allocation8 + $0x28] sm:$0xff]
          %v1217 = vld [vmem:[#allocation8 + $0x30] sm:$0xff]
          %v1218 = vld [vmem:[#allocation8 + $0x38] sm:$0xff]
          %v1219 = vld [vmem:[#allocation8 + $0x40] sm:$0xff]
          %v1220 = vld [vmem:[#allocation8 + $0x48] sm:$0xff]
          %v1221 = vld [vmem:[#allocation8 + $0x50] sm:$0xff]
          %v1222 = vld [vmem:[#allocation8 + $0x58] sm:$0xff]
          %v1223 = vld [vmem:[#allocation8 + $0x60] sm:$0xff]
          %v1224 = vld [vmem:[#allocation8 + $0x68] sm:$0xff]
          %v1225 = vld [vmem:[#allocation8 + $0x70] sm:$0xff]
          %v1226 = vld [vmem:[#allocation8 + $0x78] sm:$0xff]
          %v1227 = vld [vmem:[%s3] sm:$0x1]
          %v1229 = vlaneseq
          %v1230 = vshrl.u32 %v1229, 7
          %v1231 = vsub.s32 0, %v1230
          %v1232 = vrot.slane %v1227, %v1231
          %1234 = vmatprep.subr.mxu0 0.0
          %1235 = vmatpush1.msra.mxu0 %v1211
          %1236 = vmatprep.subr.mxu0 0.0
          %1237 = vmatpush1.msra.mxu0 %v1212
          %1238 = vmatprep.subr.mxu0 0.0
          %1239 = vmatpush1.msra.mxu0 %v1213
          %1240 = vmatprep.subr.mxu0 0.0
          %1241 = vmatpush1.msra.mxu0 %v1214
          %1242 = vmatprep.subr.mxu0 0.0
          %1243 = vmatpush1.msra.mxu0 %v1215
          %1244 = vmatprep.subr.mxu0 0.0
          %1245 = vmatpush1.msra.mxu0 %v1216
          %1246 = vmatprep.subr.mxu0 0.0
          %1247 = vmatpush1.msra.mxu0 %v1217
          %1248 = vmatprep.subr.mxu0 0.0
          %1249 = vmatpush1.msra.mxu0 %v1218
          %1250 = vmatprep.subr.mxu0 0.0
          %1251 = vmatpush1.msra.mxu0 %v1219
          %1252 = vmatprep.subr.mxu0 0.0
          %1253 = vmatpush1.msra.mxu0 %v1220
          %1254 = vmatprep.subr.mxu0 0.0
          %1255 = vmatpush1.msra.mxu0 %v1221
          %1256 = vmatprep.subr.mxu0 0.0
          %1257 = vmatpush1.msra.mxu0 %v1222
          %1258 = vmatprep.subr.mxu0 0.0
          %1259 = vmatpush1.msra.mxu0 %v1223
          %1260 = vmatprep.subr.mxu0 0.0
          %1261 = vmatpush1.msra.mxu0 %v1224
          %1262 = vmatprep.subr.mxu0 0.0
          %1263 = vmatpush1.msra.mxu0 %v1225
          %1264 = vmatprep.subr.mxu0 0.0
          %1265 = vmatpush1.msra.mxu0 %v1226
          %1266 = vmatprep.subr.mxu0 0.0
          %1267 = vmatpush1.msra.mxu0 0.0
          %1268 = vmatprep.subr.mxu0 0.0
          %1269 = vmatpush1.msra.mxu0 0.0
          %1270 = vmatprep.subr.mxu0 0.0
          %1271 = vmatpush1.msra.mxu0 0.0
          %1272 = vmatprep.subr.mxu0 0.0
          %1273 = vmatpush1.msra.mxu0 0.0
          %1274 = vmatprep.subr.mxu0 0.0
          %1275 = vmatpush1.msra.mxu0 0.0
          %1276 = vmatprep.subr.mxu0 0.0
          %1277 = vmatpush1.msra.mxu0 0.0
          %1278 = vmatprep.subr.mxu0 0.0
          %1279 = vmatpush1.msra.mxu0 0.0
          %1280 = vmatprep.subr.mxu0 0.0
          %1281 = vmatpush1.msra.mxu0 0.0
          %1282 = vmatprep.subr.mxu0 0.0
          %1283 = vmatpush1.msra.mxu0 0.0
          %1284 = vmatprep.subr.mxu0 0.0
          %1285 = vmatpush1.msra.mxu0 0.0
          %1286 = vmatprep.subr.mxu0 0.0
          %1287 = vmatpush1.msra.mxu0 0.0
          %1288 = vmatprep.subr.mxu0 0.0
          %1289 = vmatpush1.msra.mxu0 0.0
          %1290 = vmatprep.subr.mxu0 0.0
          %1291 = vmatpush1.msra.mxu0 0.0
          %1292 = vmatprep.subr.mxu0 0.0
          %1293 = vmatpush1.msra.mxu0 0.0
          %1294 = vmatprep.subr.mxu0 0.0
          %1295 = vmatpush1.msra.mxu0 0.0
          %1296 = vmatprep.subr.mxu0 0.0
          %1297 = vmatpush1.msra.mxu0 0.0
          %1298 = vmatprep.mubr.f32.mxu0 0.0
          %1299 = vmatmul.mubr.f32.gmra.mrb[0].mxu0 %v1179
          %v1300 = vpop.f32.mrb[0].mxu0
          %v1301 = vadd.f32 %v1232, %v1300
          %v1302 = vpop.f32.mrb[0].mxu0
          %1303 = vmatprep.mubr.f32.mxu0 0.0
          %1304 = vmatmul.mubr.f32.gmra.mrb[0].mxu0 %v1180
          %v1305 = vpop.f32.mrb[0].mxu0
          %v1306 = vadd.f32 %v1232, %v1305
          %v1307 = vpop.f32.mrb[0].mxu0
          %1308 = vmatprep.mubr.f32.mxu0 0.0
          %1309 = vmatmul.mubr.f32.gmra.mrb[0].mxu0 %v1181
          %v1310 = vpop.f32.mrb[0].mxu0
          %v1311 = vadd.f32 %v1232, %v1310
          %v1312 = vpop.f32.mrb[0].mxu0
          %1313 = vmatprep.mubr.f32.mxu0 0.0
          %1314 = vmatmul.mubr.f32.gmra.mrb[0].mxu0 %v1182
          %v1315 = vpop.f32.mrb[0].mxu0
          %v1316 = vadd.f32 %v1232, %v1315
          %v1317 = vpop.f32.mrb[0].mxu0
          %1318 = vmatprep.mubr.f32.mxu0 0.0
          %1319 = vmatmul.mubr.f32.gmra.mrb[0].mxu0 %v1183
          %v1320 = vpop.f32.mrb[0].mxu0
          %v1321 = vadd.f32 %v1232, %v1320
          %v1322 = vpop.f32.mrb[0].mxu0
          %1323 = vmatprep.mubr.f32.mxu0 0.0
          %1324 = vmatmul.mubr.f32.gmra.mrb[0].mxu0 %v1184
          %v1325 = vpop.f32.mrb[0].mxu0
          %v1326 = vadd.f32 %v1232, %v1325
          %v1327 = vpop.f32.mrb[0].mxu0
          %1328 = vmatprep.mubr.f32.mxu0 0.0
          %1329 = vmatmul.mubr.f32.gmra.mrb[0].mxu0 %v1185
          %v1330 = vpop.f32.mrb[0].mxu0
          %v1331 = vadd.f32 %v1232, %v1330
          %v1332 = vpop.f32.mrb[0].mxu0
          %1333 = vmatprep.mubr.f32.mxu0 0.0
          %1334 = vmatmul.mubr.f32.gmra.mrb[0].mxu0 %v1186
          %v1335 = vpop.f32.mrb[0].mxu0
          %v1336 = vadd.f32 %v1232, %v1335
          %v1337 = vpop.f32.mrb[0].mxu0
          %1338 = vmatprep.mubr.f32.mxu0 0.0
          %1339 = vmatmul.mubr.f32.gmra.mrb[0].mxu0 %v1187
          %v1340 = vpop.f32.mrb[0].mxu0
          %v1341 = vadd.f32 %v1232, %v1340
          %v1342 = vpop.f32.mrb[0].mxu0
          %1343 = vmatprep.mubr.f32.mxu0 0.0
          %1344 = vmatmul.mubr.f32.gmra.mrb[0].mxu0 %v1188
          %v1345 = vpop.f32.mrb[0].mxu0
          %v1346 = vadd.f32 %v1232, %v1345
          %v1347 = vpop.f32.mrb[0].mxu0
          %1348 = vmatprep.mubr.f32.mxu0 0.0
          %1349 = vmatmul.mubr.f32.gmra.mrb[0].mxu0 %v1189
          %v1350 = vpop.f32.mrb[0].mxu0
          %v1351 = vadd.f32 %v1232, %v1350
          %v1352 = vpop.f32.mrb[0].mxu0
          %1353 = vmatprep.mubr.f32.mxu0 0.0
          %1354 = vmatmul.mubr.f32.gmra.mrb[0].mxu0 %v1190
          %v1355 = vpop.f32.mrb[0].mxu0
          %v1356 = vadd.f32 %v1232, %v1355
          %v1357 = vpop.f32.mrb[0].mxu0
          %1358 = vmatprep.mubr.f32.mxu0 0.0
          %1359 = vmatmul.mubr.f32.gmra.mrb[0].mxu0 %v1191
          %v1360 = vpop.f32.mrb[0].mxu0
          %v1361 = vadd.f32 %v1232, %v1360
          %v1362 = vpop.f32.mrb[0].mxu0
          %1363 = vmatprep.mubr.f32.mxu0 0.0
          %1364 = vmatmul.mubr.f32.gmra.mrb[0].mxu0 %v1192
          %v1365 = vpop.f32.mrb[0].mxu0
          %v1366 = vadd.f32 %v1232, %v1365
          %v1367 = vpop.f32.mrb[0].mxu0
          %1368 = vmatprep.mubr.f32.mxu0 0.0
          %1369 = vmatmul.mubr.f32.gmra.mrb[0].mxu0 %v1193
          %v1370 = vpop.f32.mrb[0].mxu0
          %v1371 = vadd.f32 %v1232, %v1370
          %v1372 = vpop.f32.mrb[0].mxu0
          %1373 = vmatprep.mubr.f32.mxu0 0.0
          %1374 = vmatmul.mubr.f32.gmra.mrb[0].mxu0 %v1194
          %v1375 = vpop.f32.mrb[0].mxu0
          %v1376 = vadd.f32 %v1232, %v1375
          %v1377 = vpop.f32.mrb[0].mxu0
          %1378 = vmatprep.mubr.f32.mxu0 0.0
          %1379 = vmatmul.mubr.f32.gmra.mrb[0].mxu0 %v1195
          %v1380 = vpop.f32.mrb[0].mxu0
          %v1381 = vadd.f32 %v1232, %v1380
          %v1382 = vpop.f32.mrb[0].mxu0
          %1383 = vmatprep.mubr.f32.mxu0 0.0
          %1384 = vmatmul.mubr.f32.gmra.mrb[0].mxu0 %v1196
          %v1385 = vpop.f32.mrb[0].mxu0
          %v1386 = vadd.f32 %v1232, %v1385
          %v1387 = vpop.f32.mrb[0].mxu0
          %1388 = vmatprep.mubr.f32.mxu0 0.0
          %1389 = vmatmul.mubr.f32.gmra.mrb[0].mxu0 %v1197
          %v1390 = vpop.f32.mrb[0].mxu0
          %v1391 = vadd.f32 %v1232, %v1390
          %v1392 = vpop.f32.mrb[0].mxu0
          %1393 = vmatprep.mubr.f32.mxu0 0.0
          %1394 = vmatmul.mubr.f32.gmra.mrb[0].mxu0 %v1198
          %v1395 = vpop.f32.mrb[0].mxu0
          %v1396 = vadd.f32 %v1232, %v1395
          %v1397 = vpop.f32.mrb[0].mxu0
          %1398 = vmatprep.mubr.f32.mxu0 0.0
          %1399 = vmatmul.mubr.f32.gmra.mrb[0].mxu0 %v1199
          %v1400 = vpop.f32.mrb[0].mxu0
          %v1401 = vadd.f32 %v1232, %v1400
          %v1402 = vpop.f32.mrb[0].mxu0
          %1403 = vmatprep.mubr.f32.mxu0 0.0
          %1404 = vmatmul.mubr.f32.gmra.mrb[0].mxu0 %v1200
          %v1405 = vpop.f32.mrb[0].mxu0
          %v1406 = vadd.f32 %v1232, %v1405
          %v1407 = vpop.f32.mrb[0].mxu0
          %1408 = vmatprep.mubr.f32.mxu0 0.0
          %1409 = vmatmul.mubr.f32.gmra.mrb[0].mxu0 %v1201
          %v1410 = vpop.f32.mrb[0].mxu0
          %v1411 = vadd.f32 %v1232, %v1410
          %v1412 = vpop.f32.mrb[0].mxu0
          %1413 = vmatprep.mubr.f32.mxu0 0.0
          %1414 = vmatmul.mubr.f32.gmra.mrb[0].mxu0 %v1202
          %v1415 = vpop.f32.mrb[0].mxu0
          %v1416 = vadd.f32 %v1232, %v1415
          %v1417 = vpop.f32.mrb[0].mxu0
          %1418 = vmatprep.mubr.f32.mxu0 0.0
          %1419 = vmatmul.mubr.f32.gmra.mrb[0].mxu0 %v1203
          %v1420 = vpop.f32.mrb[0].mxu0
          %v1421 = vadd.f32 %v1232, %v1420
          %v1422 = vpop.f32.mrb[0].mxu0
          %1423 = vmatprep.mubr.f32.mxu0 0.0
          %1424 = vmatmul.mubr.f32.gmra.mrb[0].mxu0 %v1204
          %v1425 = vpop.f32.mrb[0].mxu0
          %v1426 = vadd.f32 %v1232, %v1425
          %v1427 = vpop.f32.mrb[0].mxu0
          %1428 = vmatprep.mubr.f32.mxu0 0.0
          %1429 = vmatmul.mubr.f32.gmra.mrb[0].mxu0 %v1205
          %v1430 = vpop.f32.mrb[0].mxu0
          %v1431 = vadd.f32 %v1232, %v1430
          %v1432 = vpop.f32.mrb[0].mxu0
          %1433 = vmatprep.mubr.f32.mxu0 0.0
          %1434 = vmatmul.mubr.f32.gmra.mrb[0].mxu0 %v1206
          %v1435 = vpop.f32.mrb[0].mxu0
          %v1436 = vadd.f32 %v1232, %v1435
          %v1437 = vpop.f32.mrb[0].mxu0
          %1438 = vmatprep.mubr.f32.mxu0 0.0
          %1439 = vmatmul.mubr.f32.gmra.mrb[0].mxu0 %v1207
          %v1440 = vpop.f32.mrb[0].mxu0
          %v1441 = vadd.f32 %v1232, %v1440
          %v1442 = vpop.f32.mrb[0].mxu0
          %1443 = vmatprep.mubr.f32.mxu0 0.0
          %1444 = vmatmul.mubr.f32.gmra.mrb[0].mxu0 %v1208
          %v1445 = vpop.f32.mrb[0].mxu0
          %v1446 = vadd.f32 %v1232, %v1445
          %v1447 = vpop.f32.mrb[0].mxu0
          %1448 = vmatprep.mubr.f32.mxu0 0.0
          %1449 = vmatmul.mubr.f32.gmra.mrb[0].mxu0 %v1209
          %v1450 = vpop.f32.mrb[0].mxu0
          %v1451 = vadd.f32 %v1232, %v1450
          %v1452 = vpop.f32.mrb[0].mxu0
          %1453 = vmatprep.mubr.f32.mxu0 0.0
          %1454 = vmatmul.mubr.f32.gmra.mrb[0].mxu0 %v1210
          %v1455 = vpop.f32.mrb[0].mxu0
          %v1456 = vadd.f32 %v1232, %v1455
          %v1457 = vpop.f32.mrb[0].mxu0
          %1458 = vdwg.mxu0
          %v1459 = vmul.f32 %v1115, %v1147
          %v1460 = vmul.f32 %v1116, %v1148
          %v1461 = vmul.f32 %v1117, %v1149
          %v1462 = vmul.f32 %v1118, %v1150
          %v1463 = vmul.f32 %v1119, %v1151
          %v1464 = vmul.f32 %v1120, %v1152
          %v1465 = vmul.f32 %v1121, %v1153
          %v1466 = vmul.f32 %v1122, %v1154
          %v1467 = vmul.f32 %v1123, %v1155
          %v1468 = vmul.f32 %v1124, %v1156
          %v1469 = vmul.f32 %v1125, %v1157
          %v1470 = vmul.f32 %v1126, %v1158
          %v1471 = vmul.f32 %v1127, %v1159
          %v1472 = vmul.f32 %v1128, %v1160
          %v1473 = vmul.f32 %v1129, %v1161
          %v1474 = vmul.f32 %v1130, %v1162
          %v1475 = vmul.f32 %v1131, %v1163
          %v1476 = vmul.f32 %v1132, %v1164
          %v1477 = vmul.f32 %v1133, %v1165
          %v1478 = vmul.f32 %v1134, %v1166
          %v1479 = vmul.f32 %v1135, %v1167
          %v1480 = vmul.f32 %v1136, %v1168
          %v1481 = vmul.f32 %v1137, %v1169
          %v1482 = vmul.f32 %v1138, %v1170
          %v1483 = vmul.f32 %v1139, %v1171
          %v1484 = vmul.f32 %v1140, %v1172
          %v1485 = vmul.f32 %v1141, %v1173
          %v1486 = vmul.f32 %v1142, %v1174
          %v1487 = vmul.f32 %v1143, %v1175
          %v1488 = vmul.f32 %v1144, %v1176
          %v1489 = vmul.f32 %v1145, %v1177
          %v1490 = vmul.f32 %v1146, %v1178
          %v1491 = vld [vmem:[#allocation9] sm:$0xff]
          %v1492 = vld [vmem:[#allocation9 + $0x8] sm:$0xff]
          %v1493 = vld [vmem:[#allocation9 + $0x10] sm:$0xff]
          %v1494 = vld [vmem:[#allocation9 + $0x18] sm:$0xff]
          %v1495 = vld [vmem:[#allocation9 + $0x20] sm:$0xff]
          %v1496 = vld [vmem:[#allocation9 + $0x28] sm:$0xff]
          %v1497 = vld [vmem:[#allocation9 + $0x30] sm:$0xff]
          %v1498 = vld [vmem:[#allocation9 + $0x38] sm:$0xff]
          %v1499 = vld [vmem:[#allocation9 + $0x40] sm:$0xff]
          %v1500 = vld [vmem:[#allocation9 + $0x48] sm:$0xff]
          %v1501 = vld [vmem:[#allocation9 + $0x50] sm:$0xff]
          %v1502 = vld [vmem:[#allocation9 + $0x58] sm:$0xff]
          %v1503 = vld [vmem:[#allocation9 + $0x60] sm:$0xff]
          %v1504 = vld [vmem:[#allocation9 + $0x68] sm:$0xff]
          %v1505 = vld [vmem:[#allocation9 + $0x70] sm:$0xff]
          %v1506 = vld [vmem:[#allocation9 + $0x78] sm:$0xff]
          %v1507 = vld [vmem:[%s5] sm:$0x1]
          %v1509 = vlaneseq
          %v1510 = vshrl.u32 %v1509, 7
          %v1511 = vsub.s32 0, %v1510
          %v1512 = vrot.slane %v1507, %v1511
          %1514 = vmatprep.subr.mxu0 0.0
          %1515 = vmatpush1.msra.mxu0 %v1491
          %1516 = vmatprep.subr.mxu0 0.0
          %1517 = vmatpush1.msra.mxu0 %v1492
          %1518 = vmatprep.subr.mxu0 0.0
          %1519 = vmatpush1.msra.mxu0 %v1493
          %1520 = vmatprep.subr.mxu0 0.0
          %1521 = vmatpush1.msra.mxu0 %v1494
          %1522 = vmatprep.subr.mxu0 0.0
          %1523 = vmatpush1.msra.mxu0 %v1495
          %1524 = vmatprep.subr.mxu0 0.0
          %1525 = vmatpush1.msra.mxu0 %v1496
          %1526 = vmatprep.subr.mxu0 0.0
          %1527 = vmatpush1.msra.mxu0 %v1497
          %1528 = vmatprep.subr.mxu0 0.0
          %1529 = vmatpush1.msra.mxu0 %v1498
          %1530 = vmatprep.subr.mxu0 0.0
          %1531 = vmatpush1.msra.mxu0 %v1499
          %1532 = vmatprep.subr.mxu0 0.0
          %1533 = vmatpush1.msra.mxu0 %v1500
          %1534 = vmatprep.subr.mxu0 0.0
          %1535 = vmatpush1.msra.mxu0 %v1501
          %1536 = vmatprep.subr.mxu0 0.0
          %1537 = vmatpush1.msra.mxu0 %v1502
          %1538 = vmatprep.subr.mxu0 0.0
          %1539 = vmatpush1.msra.mxu0 %v1503
          %1540 = vmatprep.subr.mxu0 0.0
          %1541 = vmatpush1.msra.mxu0 %v1504
          %1542 = vmatprep.subr.mxu0 0.0
          %1543 = vmatpush1.msra.mxu0 %v1505
          %1544 = vmatprep.subr.mxu0 0.0
          %1545 = vmatpush1.msra.mxu0 %v1506
          %1546 = vmatprep.subr.mxu0 0.0
          %1547 = vmatpush1.msra.mxu0 0.0
          %1548 = vmatprep.subr.mxu0 0.0
          %1549 = vmatpush1.msra.mxu0 0.0
          %1550 = vmatprep.subr.mxu0 0.0
          %1551 = vmatpush1.msra.mxu0 0.0
          %1552 = vmatprep.subr.mxu0 0.0
          %1553 = vmatpush1.msra.mxu0 0.0
          %1554 = vmatprep.subr.mxu0 0.0
          %1555 = vmatpush1.msra.mxu0 0.0
          %1556 = vmatprep.subr.mxu0 0.0
          %1557 = vmatpush1.msra.mxu0 0.0
          %1558 = vmatprep.subr.mxu0 0.0
          %1559 = vmatpush1.msra.mxu0 0.0
          %1560 = vmatprep.subr.mxu0 0.0
          %1561 = vmatpush1.msra.mxu0 0.0
          %1562 = vmatprep.subr.mxu0 0.0
          %1563 = vmatpush1.msra.mxu0 0.0
          %1564 = vmatprep.subr.mxu0 0.0
          %1565 = vmatpush1.msra.mxu0 0.0
          %1566 = vmatprep.subr.mxu0 0.0
          %1567 = vmatpush1.msra.mxu0 0.0
          %1568 = vmatprep.subr.mxu0 0.0
          %1569 = vmatpush1.msra.mxu0 0.0
          %1570 = vmatprep.subr.mxu0 0.0
          %1571 = vmatpush1.msra.mxu0 0.0
          %1572 = vmatprep.subr.mxu0 0.0
          %1573 = vmatpush1.msra.mxu0 0.0
          %1574 = vmatprep.subr.mxu0 0.0
          %1575 = vmatpush1.msra.mxu0 0.0
          %1576 = vmatprep.subr.mxu0 0.0
          %1577 = vmatpush1.msra.mxu0 0.0
          %1578 = vmatprep.mubr.f32.mxu0 0.0
          %1579 = vmatmul.mubr.f32.gmra.mrb[0].mxu0 %v1459
          %v1580 = vpop.f32.mrb[0].mxu0
          %v1581 = vadd.f32 %v1512, %v1580
          %v1582 = vpop.f32.mrb[0].mxu0
          %1583 = vmatprep.mubr.f32.mxu0 0.0
          %1584 = vmatmul.mubr.f32.gmra.mrb[0].mxu0 %v1460
          %v1585 = vpop.f32.mrb[0].mxu0
          %v1586 = vadd.f32 %v1512, %v1585
          %v1587 = vpop.f32.mrb[0].mxu0
          %1588 = vmatprep.mubr.f32.mxu0 0.0
          %1589 = vmatmul.mubr.f32.gmra.mrb[0].mxu0 %v1461
          %v1590 = vpop.f32.mrb[0].mxu0
          %v1591 = vadd.f32 %v1512, %v1590
          %v1592 = vpop.f32.mrb[0].mxu0
          %1593 = vmatprep.mubr.f32.mxu0 0.0
          %1594 = vmatmul.mubr.f32.gmra.mrb[0].mxu0 %v1462
          %v1595 = vpop.f32.mrb[0].mxu0
          %v1596 = vadd.f32 %v1512, %v1595
          %v1597 = vpop.f32.mrb[0].mxu0
          %1598 = vmatprep.mubr.f32.mxu0 0.0
          %1599 = vmatmul.mubr.f32.gmra.mrb[0].mxu0 %v1463
          %v1600 = vpop.f32.mrb[0].mxu0
          %v1601 = vadd.f32 %v1512, %v1600
          %v1602 = vpop.f32.mrb[0].mxu0
          %1603 = vmatprep.mubr.f32.mxu0 0.0
          %1604 = vmatmul.mubr.f32.gmra.mrb[0].mxu0 %v1464
          %v1605 = vpop.f32.mrb[0].mxu0
          %v1606 = vadd.f32 %v1512, %v1605
          %v1607 = vpop.f32.mrb[0].mxu0
          %1608 = vmatprep.mubr.f32.mxu0 0.0
          %1609 = vmatmul.mubr.f32.gmra.mrb[0].mxu0 %v1465
          %v1610 = vpop.f32.mrb[0].mxu0
          %v1611 = vadd.f32 %v1512, %v1610
          %v1612 = vpop.f32.mrb[0].mxu0
          %1613 = vmatprep.mubr.f32.mxu0 0.0
          %1614 = vmatmul.mubr.f32.gmra.mrb[0].mxu0 %v1466
          %v1615 = vpop.f32.mrb[0].mxu0
          %v1616 = vadd.f32 %v1512, %v1615
          %v1617 = vpop.f32.mrb[0].mxu0
          %1618 = vmatprep.mubr.f32.mxu0 0.0
          %1619 = vmatmul.mubr.f32.gmra.mrb[0].mxu0 %v1467
          %v1620 = vpop.f32.mrb[0].mxu0
          %v1621 = vadd.f32 %v1512, %v1620
          %v1622 = vpop.f32.mrb[0].mxu0
          %1623 = vmatprep.mubr.f32.mxu0 0.0
          %1624 = vmatmul.mubr.f32.gmra.mrb[0].mxu0 %v1468
          %v1625 = vpop.f32.mrb[0].mxu0
          %v1626 = vadd.f32 %v1512, %v1625
          %v1627 = vpop.f32.mrb[0].mxu0
          %1628 = vmatprep.mubr.f32.mxu0 0.0
          %1629 = vmatmul.mubr.f32.gmra.mrb[0].mxu0 %v1469
          %v1630 = vpop.f32.mrb[0].mxu0
          %v1631 = vadd.f32 %v1512, %v1630
          %v1632 = vpop.f32.mrb[0].mxu0
          %1633 = vmatprep.mubr.f32.mxu0 0.0
          %1634 = vmatmul.mubr.f32.gmra.mrb[0].mxu0 %v1470
          %v1635 = vpop.f32.mrb[0].mxu0
          %v1636 = vadd.f32 %v1512, %v1635
          %v1637 = vpop.f32.mrb[0].mxu0
          %1638 = vmatprep.mubr.f32.mxu0 0.0
          %1639 = vmatmul.mubr.f32.gmra.mrb[0].mxu0 %v1471
          %v1640 = vpop.f32.mrb[0].mxu0
          %v1641 = vadd.f32 %v1512, %v1640
          %v1642 = vpop.f32.mrb[0].mxu0
          %1643 = vmatprep.mubr.f32.mxu0 0.0
          %1644 = vmatmul.mubr.f32.gmra.mrb[0].mxu0 %v1472
          %v1645 = vpop.f32.mrb[0].mxu0
          %v1646 = vadd.f32 %v1512, %v1645
          %v1647 = vpop.f32.mrb[0].mxu0
          %1648 = vmatprep.mubr.f32.mxu0 0.0
          %1649 = vmatmul.mubr.f32.gmra.mrb[0].mxu0 %v1473
          %v1650 = vpop.f32.mrb[0].mxu0
          %v1651 = vadd.f32 %v1512, %v1650
          %v1652 = vpop.f32.mrb[0].mxu0
          %1653 = vmatprep.mubr.f32.mxu0 0.0
          %1654 = vmatmul.mubr.f32.gmra.mrb[0].mxu0 %v1474
          %v1655 = vpop.f32.mrb[0].mxu0
          %v1656 = vadd.f32 %v1512, %v1655
          %v1657 = vpop.f32.mrb[0].mxu0
          %1658 = vmatprep.mubr.f32.mxu0 0.0
          %1659 = vmatmul.mubr.f32.gmra.mrb[0].mxu0 %v1475
          %v1660 = vpop.f32.mrb[0].mxu0
          %v1661 = vadd.f32 %v1512, %v1660
          %v1662 = vpop.f32.mrb[0].mxu0
          %1663 = vmatprep.mubr.f32.mxu0 0.0
          %1664 = vmatmul.mubr.f32.gmra.mrb[0].mxu0 %v1476
          %v1665 = vpop.f32.mrb[0].mxu0
          %v1666 = vadd.f32 %v1512, %v1665
          %v1667 = vpop.f32.mrb[0].mxu0
          %1668 = vmatprep.mubr.f32.mxu0 0.0
          %1669 = vmatmul.mubr.f32.gmra.mrb[0].mxu0 %v1477
          %v1670 = vpop.f32.mrb[0].mxu0
          %v1671 = vadd.f32 %v1512, %v1670
          %v1672 = vpop.f32.mrb[0].mxu0
          %1673 = vmatprep.mubr.f32.mxu0 0.0
          %1674 = vmatmul.mubr.f32.gmra.mrb[0].mxu0 %v1478
          %v1675 = vpop.f32.mrb[0].mxu0
          %v1676 = vadd.f32 %v1512, %v1675
          %v1677 = vpop.f32.mrb[0].mxu0
          %1678 = vmatprep.mubr.f32.mxu0 0.0
          %1679 = vmatmul.mubr.f32.gmra.mrb[0].mxu0 %v1479
          %v1680 = vpop.f32.mrb[0].mxu0
          %v1681 = vadd.f32 %v1512, %v1680
          %v1682 = vpop.f32.mrb[0].mxu0
          %1683 = vmatprep.mubr.f32.mxu0 0.0
          %1684 = vmatmul.mubr.f32.gmra.mrb[0].mxu0 %v1480
          %v1685 = vpop.f32.mrb[0].mxu0
          %v1686 = vadd.f32 %v1512, %v1685
          %v1687 = vpop.f32.mrb[0].mxu0
          %1688 = vmatprep.mubr.f32.mxu0 0.0
          %1689 = vmatmul.mubr.f32.gmra.mrb[0].mxu0 %v1481
          %v1690 = vpop.f32.mrb[0].mxu0
          %v1691 = vadd.f32 %v1512, %v1690
          %v1692 = vpop.f32.mrb[0].mxu0
          %1693 = vmatprep.mubr.f32.mxu0 0.0
          %1694 = vmatmul.mubr.f32.gmra.mrb[0].mxu0 %v1482
          %v1695 = vpop.f32.mrb[0].mxu0
          %v1696 = vadd.f32 %v1512, %v1695
          %v1697 = vpop.f32.mrb[0].mxu0
          %1698 = vmatprep.mubr.f32.mxu0 0.0
          %1699 = vmatmul.mubr.f32.gmra.mrb[0].mxu0 %v1483
          %v1700 = vpop.f32.mrb[0].mxu0
          %v1701 = vadd.f32 %v1512, %v1700
          %v1702 = vpop.f32.mrb[0].mxu0
          %1703 = vmatprep.mubr.f32.mxu0 0.0
          %1704 = vmatmul.mubr.f32.gmra.mrb[0].mxu0 %v1484
          %v1705 = vpop.f32.mrb[0].mxu0
          %v1706 = vadd.f32 %v1512, %v1705
          %v1707 = vpop.f32.mrb[0].mxu0
          %1708 = vmatprep.mubr.f32.mxu0 0.0
          %1709 = vmatmul.mubr.f32.gmra.mrb[0].mxu0 %v1485
          %v1710 = vpop.f32.mrb[0].mxu0
          %v1711 = vadd.f32 %v1512, %v1710
          %v1712 = vpop.f32.mrb[0].mxu0
          %1713 = vmatprep.mubr.f32.mxu0 0.0
          %1714 = vmatmul.mubr.f32.gmra.mrb[0].mxu0 %v1486
          %v1715 = vpop.f32.mrb[0].mxu0
          %v1716 = vadd.f32 %v1512, %v1715
          %v1717 = vpop.f32.mrb[0].mxu0
          %1718 = vmatprep.mubr.f32.mxu0 0.0
          %1719 = vmatmul.mubr.f32.gmra.mrb[0].mxu0 %v1487
          %v1720 = vpop.f32.mrb[0].mxu0
          %v1721 = vadd.f32 %v1512, %v1720
          %v1722 = vpop.f32.mrb[0].mxu0
          %1723 = vmatprep.mubr.f32.mxu0 0.0
          %1724 = vmatmul.mubr.f32.gmra.mrb[0].mxu0 %v1488
          %v1725 = vpop.f32.mrb[0].mxu0
          %v1726 = vadd.f32 %v1512, %v1725
          %v1727 = vpop.f32.mrb[0].mxu0
          %1728 = vmatprep.mubr.f32.mxu0 0.0
          %1729 = vmatmul.mubr.f32.gmra.mrb[0].mxu0 %v1489
          %v1730 = vpop.f32.mrb[0].mxu0
          %v1731 = vadd.f32 %v1512, %v1730
          %v1732 = vpop.f32.mrb[0].mxu0
          %1733 = vmatprep.mubr.f32.mxu0 0.0
          %1734 = vmatmul.mubr.f32.gmra.mrb[0].mxu0 %v1490
          %v1735 = vpop.f32.mrb[0].mxu0
          %v1736 = vadd.f32 %v1512, %v1735
          %v1737 = vpop.f32.mrb[0].mxu0
          %1738 = vdwg.mxu0
          %vm1739 = vcmp.gt.f32.partialorder %v1301, 0.0
          %vm1740 = vcmp.gt.f32.partialorder %v1306, 0.0
          %vm1741 = vcmp.gt.f32.partialorder %v1311, 0.0
          %vm1742 = vcmp.gt.f32.partialorder %v1316, 0.0
          %vm1743 = vcmp.gt.f32.partialorder %v1321, 0.0
          %vm1744 = vcmp.gt.f32.partialorder %v1326, 0.0
          %vm1745 = vcmp.gt.f32.partialorder %v1331, 0.0
          %vm1746 = vcmp.gt.f32.partialorder %v1336, 0.0
          %vm1747 = vcmp.gt.f32.partialorder %v1341, 0.0
          %vm1748 = vcmp.gt.f32.partialorder %v1346, 0.0
          %vm1749 = vcmp.gt.f32.partialorder %v1351, 0.0
          %vm1750 = vcmp.gt.f32.partialorder %v1356, 0.0
          %vm1751 = vcmp.gt.f32.partialorder %v1361, 0.0
          %vm1752 = vcmp.gt.f32.partialorder %v1366, 0.0
          %vm1753 = vcmp.gt.f32.partialorder %v1371, 0.0
          %vm1754 = vcmp.gt.f32.partialorder %v1376, 0.0
          %vm1755 = vcmp.gt.f32.partialorder %v1381, 0.0
          %vm1756 = vcmp.gt.f32.partialorder %v1386, 0.0
          %vm1757 = vcmp.gt.f32.partialorder %v1391, 0.0
          %vm1758 = vcmp.gt.f32.partialorder %v1396, 0.0
          %vm1759 = vcmp.gt.f32.partialorder %v1401, 0.0
          %vm1760 = vcmp.gt.f32.partialorder %v1406, 0.0
          %vm1761 = vcmp.gt.f32.partialorder %v1411, 0.0
          %vm1762 = vcmp.gt.f32.partialorder %v1416, 0.0
          %vm1763 = vcmp.gt.f32.partialorder %v1421, 0.0
          %vm1764 = vcmp.gt.f32.partialorder %v1426, 0.0
          %vm1765 = vcmp.gt.f32.partialorder %v1431, 0.0
          %vm1766 = vcmp.gt.f32.partialorder %v1436, 0.0
          %vm1767 = vcmp.gt.f32.partialorder %v1441, 0.0
          %vm1768 = vcmp.gt.f32.partialorder %v1446, 0.0
          %vm1769 = vcmp.gt.f32.partialorder %v1451, 0.0
          %vm1770 = vcmp.gt.f32.partialorder %v1456, 0.0
          %v1771 = vmul.f32 %v1301, 0.01
          %v1772 = vmul.f32 %v1306, 0.01
          %v1773 = vmul.f32 %v1311, 0.01
          %v1774 = vmul.f32 %v1316, 0.01
          %v1775 = vmul.f32 %v1321, 0.01
          %v1776 = vmul.f32 %v1326, 0.01
          %v1777 = vmul.f32 %v1331, 0.01
          %v1778 = vmul.f32 %v1336, 0.01
          %v1779 = vmul.f32 %v1341, 0.01
          %v1780 = vmul.f32 %v1346, 0.01
          %v1781 = vmul.f32 %v1351, 0.01
          %v1782 = vmul.f32 %v1356, 0.01
          %v1783 = vmul.f32 %v1361, 0.01
          %v1784 = vmul.f32 %v1366, 0.01
          %v1785 = vmul.f32 %v1371, 0.01
          %v1786 = vmul.f32 %v1376, 0.01
          %v1787 = vmul.f32 %v1381, 0.01
          %v1788 = vmul.f32 %v1386, 0.01
          %v1789 = vmul.f32 %v1391, 0.01
          %v1790 = vmul.f32 %v1396, 0.01
          %v1791 = vmul.f32 %v1401, 0.01
          %v1792 = vmul.f32 %v1406, 0.01
          %v1793 = vmul.f32 %v1411, 0.01
          %v1794 = vmul.f32 %v1416, 0.01
          %v1795 = vmul.f32 %v1421, 0.01
          %v1796 = vmul.f32 %v1426, 0.01
          %v1797 = vmul.f32 %v1431, 0.01
          %v1798 = vmul.f32 %v1436, 0.01
          %v1799 = vmul.f32 %v1441, 0.01
          %v1800 = vmul.f32 %v1446, 0.01
          %v1801 = vmul.f32 %v1451, 0.01
          %v1802 = vmul.f32 %v1456, 0.01
          %v1803 = vsel %vm1739, %v1301, %v1771
          %v1804 = vsel %vm1740, %v1306, %v1772
          %v1805 = vsel %vm1741, %v1311, %v1773
          %v1806 = vsel %vm1742, %v1316, %v1774
          %v1807 = vsel %vm1743, %v1321, %v1775
          %v1808 = vsel %vm1744, %v1326, %v1776
          %v1809 = vsel %vm1745, %v1331, %v1777
          %v1810 = vsel %vm1746, %v1336, %v1778
          %v1811 = vsel %vm1747, %v1341, %v1779
          %v1812 = vsel %vm1748, %v1346, %v1780
          %v1813 = vsel %vm1749, %v1351, %v1781
          %v1814 = vsel %vm1750, %v1356, %v1782
          %v1815 = vsel %vm1751, %v1361, %v1783
          %v1816 = vsel %vm1752, %v1366, %v1784
          %v1817 = vsel %vm1753, %v1371, %v1785
          %v1818 = vsel %vm1754, %v1376, %v1786
          %v1819 = vsel %vm1755, %v1381, %v1787
          %v1820 = vsel %vm1756, %v1386, %v1788
          %v1821 = vsel %vm1757, %v1391, %v1789
          %v1822 = vsel %vm1758, %v1396, %v1790
          %v1823 = vsel %vm1759, %v1401, %v1791
          %v1824 = vsel %vm1760, %v1406, %v1792
          %v1825 = vsel %vm1761, %v1411, %v1793
          %v1826 = vsel %vm1762, %v1416, %v1794
          %v1827 = vsel %vm1763, %v1421, %v1795
          %v1828 = vsel %vm1764, %v1426, %v1796
          %v1829 = vsel %vm1765, %v1431, %v1797
          %v1830 = vsel %vm1766, %v1436, %v1798
          %v1831 = vsel %vm1767, %v1441, %v1799
          %v1832 = vsel %vm1768, %v1446, %v1800
          %v1833 = vsel %vm1769, %v1451, %v1801
          %v1834 = vsel %vm1770, %v1456, %v1802
          %vm1835 = vcmp.gt.f32.partialorder %v1581, 0.0
          %vm1836 = vcmp.gt.f32.partialorder %v1586, 0.0
          %vm1837 = vcmp.gt.f32.partialorder %v1591, 0.0
          %vm1838 = vcmp.gt.f32.partialorder %v1596, 0.0
          %vm1839 = vcmp.gt.f32.partialorder %v1601, 0.0
          %vm1840 = vcmp.gt.f32.partialorder %v1606, 0.0
          %vm1841 = vcmp.gt.f32.partialorder %v1611, 0.0
          %vm1842 = vcmp.gt.f32.partialorder %v1616, 0.0
          %vm1843 = vcmp.gt.f32.partialorder %v1621, 0.0
          %vm1844 = vcmp.gt.f32.partialorder %v1626, 0.0
          %vm1845 = vcmp.gt.f32.partialorder %v1631, 0.0
          %vm1846 = vcmp.gt.f32.partialorder %v1636, 0.0
          %vm1847 = vcmp.gt.f32.partialorder %v1641, 0.0
          %vm1848 = vcmp.gt.f32.partialorder %v1646, 0.0
          %vm1849 = vcmp.gt.f32.partialorder %v1651, 0.0
          %vm1850 = vcmp.gt.f32.partialorder %v1656, 0.0
          %vm1851 = vcmp.gt.f32.partialorder %v1661, 0.0
          %vm1852 = vcmp.gt.f32.partialorder %v1666, 0.0
          %vm1853 = vcmp.gt.f32.partialorder %v1671, 0.0
          %vm1854 = vcmp.gt.f32.partialorder %v1676, 0.0
          %vm1855 = vcmp.gt.f32.partialorder %v1681, 0.0
          %vm1856 = vcmp.gt.f32.partialorder %v1686, 0.0
          %vm1857 = vcmp.gt.f32.partialorder %v1691, 0.0
          %vm1858 = vcmp.gt.f32.partialorder %v1696, 0.0
          %vm1859 = vcmp.gt.f32.partialorder %v1701, 0.0
          %vm1860 = vcmp.gt.f32.partialorder %v1706, 0.0
          %vm1861 = vcmp.gt.f32.partialorder %v1711, 0.0
          %vm1862 = vcmp.gt.f32.partialorder %v1716, 0.0
          %vm1863 = vcmp.gt.f32.partialorder %v1721, 0.0
          %vm1864 = vcmp.gt.f32.partialorder %v1726, 0.0
          %vm1865 = vcmp.gt.f32.partialorder %v1731, 0.0
          %vm1866 = vcmp.gt.f32.partialorder %v1736, 0.0
          %v1867 = vmul.f32 %v1581, 0.01
          %v1868 = vmul.f32 %v1586, 0.01
          %v1869 = vmul.f32 %v1591, 0.01
          %v1870 = vmul.f32 %v1596, 0.01
          %v1871 = vmul.f32 %v1601, 0.01
          %v1872 = vmul.f32 %v1606, 0.01
          %v1873 = vmul.f32 %v1611, 0.01
          %v1874 = vmul.f32 %v1616, 0.01
          %v1875 = vmul.f32 %v1621, 0.01
          %v1876 = vmul.f32 %v1626, 0.01
          %v1877 = vmul.f32 %v1631, 0.01
          %v1878 = vmul.f32 %v1636, 0.01
          %v1879 = vmul.f32 %v1641, 0.01
          %v1880 = vmul.f32 %v1646, 0.01
          %v1881 = vmul.f32 %v1651, 0.01
          %v1882 = vmul.f32 %v1656, 0.01
          %v1883 = vmul.f32 %v1661, 0.01
          %v1884 = vmul.f32 %v1666, 0.01
          %v1885 = vmul.f32 %v1671, 0.01
          %v1886 = vmul.f32 %v1676, 0.01
          %v1887 = vmul.f32 %v1681, 0.01
          %v1888 = vmul.f32 %v1686, 0.01
          %v1889 = vmul.f32 %v1691, 0.01
          %v1890 = vmul.f32 %v1696, 0.01
          %v1891 = vmul.f32 %v1701, 0.01
          %v1892 = vmul.f32 %v1706, 0.01
          %v1893 = vmul.f32 %v1711, 0.01
          %v1894 = vmul.f32 %v1716, 0.01
          %v1895 = vmul.f32 %v1721, 0.01
          %v1896 = vmul.f32 %v1726, 0.01
          %v1897 = vmul.f32 %v1731, 0.01
          %v1898 = vmul.f32 %v1736, 0.01
          %v1899 = vsel %vm1835, %v1581, %v1867
          %v1900 = vsel %vm1836, %v1586, %v1868
          %v1901 = vsel %vm1837, %v1591, %v1869
          %v1902 = vsel %vm1838, %v1596, %v1870
          %v1903 = vsel %vm1839, %v1601, %v1871
          %v1904 = vsel %vm1840, %v1606, %v1872
          %v1905 = vsel %vm1841, %v1611, %v1873
          %v1906 = vsel %vm1842, %v1616, %v1874
          %v1907 = vsel %vm1843, %v1621, %v1875
          %v1908 = vsel %vm1844, %v1626, %v1876
          %v1909 = vsel %vm1845, %v1631, %v1877
          %v1910 = vsel %vm1846, %v1636, %v1878
          %v1911 = vsel %vm1847, %v1641, %v1879
          %v1912 = vsel %vm1848, %v1646, %v1880
          %v1913 = vsel %vm1849, %v1651, %v1881
          %v1914 = vsel %vm1850, %v1656, %v1882
          %v1915 = vsel %vm1851, %v1661, %v1883
          %v1916 = vsel %vm1852, %v1666, %v1884
          %v1917 = vsel %vm1853, %v1671, %v1885
          %v1918 = vsel %vm1854, %v1676, %v1886
          %v1919 = vsel %vm1855, %v1681, %v1887
          %v1920 = vsel %vm1856, %v1686, %v1888
          %v1921 = vsel %vm1857, %v1691, %v1889
          %v1922 = vsel %vm1858, %v1696, %v1890
          %v1923 = vsel %vm1859, %v1701, %v1891
          %v1924 = vsel %vm1860, %v1706, %v1892
          %v1925 = vsel %vm1861, %v1711, %v1893
          %v1926 = vsel %vm1862, %v1716, %v1894
          %v1927 = vsel %vm1863, %v1721, %v1895
          %v1928 = vsel %vm1864, %v1726, %v1896
          %v1929 = vsel %vm1865, %v1731, %v1897
          %v1930 = vsel %vm1866, %v1736, %v1898
          %v1931 = vadd.f32 %v1803, %v1899
          %v1932 = vadd.f32 %v1804, %v1900
          %v1933 = vadd.f32 %v1805, %v1901
          %v1934 = vadd.f32 %v1806, %v1902
          %v1935 = vadd.f32 %v1807, %v1903
          %v1936 = vadd.f32 %v1808, %v1904
          %v1937 = vadd.f32 %v1809, %v1905
          %v1938 = vadd.f32 %v1810, %v1906
          %v1939 = vadd.f32 %v1811, %v1907
          %v1940 = vadd.f32 %v1812, %v1908
          %v1941 = vadd.f32 %v1813, %v1909
          %v1942 = vadd.f32 %v1814, %v1910
          %v1943 = vadd.f32 %v1815, %v1911
          %v1944 = vadd.f32 %v1816, %v1912
          %v1945 = vadd.f32 %v1817, %v1913
          %v1946 = vadd.f32 %v1818, %v1914
          %v1947 = vadd.f32 %v1819, %v1915
          %v1948 = vadd.f32 %v1820, %v1916
          %v1949 = vadd.f32 %v1821, %v1917
          %v1950 = vadd.f32 %v1822, %v1918
          %v1951 = vadd.f32 %v1823, %v1919
          %v1952 = vadd.f32 %v1824, %v1920
          %v1953 = vadd.f32 %v1825, %v1921
          %v1954 = vadd.f32 %v1826, %v1922
          %v1955 = vadd.f32 %v1827, %v1923
          %v1956 = vadd.f32 %v1828, %v1924
          %v1957 = vadd.f32 %v1829, %v1925
          %v1958 = vadd.f32 %v1830, %v1926
          %v1959 = vadd.f32 %v1831, %v1927
          %v1960 = vadd.f32 %v1832, %v1928
          %v1961 = vadd.f32 %v1833, %v1929
          %v1962 = vadd.f32 %v1834, %v1930
          %v1963 = vmul.f32 %v1931, %v1931
          %v1964 = vmul.f32 %v1932, %v1932
          %v1965 = vmul.f32 %v1933, %v1933
          %v1966 = vmul.f32 %v1934, %v1934
          %v1967 = vmul.f32 %v1935, %v1935
          %v1968 = vmul.f32 %v1936, %v1936
          %v1969 = vmul.f32 %v1937, %v1937
          %v1970 = vmul.f32 %v1938, %v1938
          %v1971 = vmul.f32 %v1939, %v1939
          %v1972 = vmul.f32 %v1940, %v1940
          %v1973 = vmul.f32 %v1941, %v1941
          %v1974 = vmul.f32 %v1942, %v1942
          %v1975 = vmul.f32 %v1943, %v1943
          %v1976 = vmul.f32 %v1944, %v1944
          %v1977 = vmul.f32 %v1945, %v1945
          %v1978 = vmul.f32 %v1946, %v1946
          %v1979 = vmul.f32 %v1947, %v1947
          %v1980 = vmul.f32 %v1948, %v1948
          %v1981 = vmul.f32 %v1949, %v1949
          %v1982 = vmul.f32 %v1950, %v1950
          %v1983 = vmul.f32 %v1951, %v1951
          %v1984 = vmul.f32 %v1952, %v1952
          %v1985 = vmul.f32 %v1953, %v1953
          %v1986 = vmul.f32 %v1954, %v1954
          %v1987 = vmul.f32 %v1955, %v1955
          %v1988 = vmul.f32 %v1956, %v1956
          %v1989 = vmul.f32 %v1957, %v1957
          %v1990 = vmul.f32 %v1958, %v1958
          %v1991 = vmul.f32 %v1959, %v1959
          %v1992 = vmul.f32 %v1960, %v1960
          %v1993 = vmul.f32 %v1961, %v1961
          %v1994 = vmul.f32 %v1962, %v1962
          %1995 = vadd.xlane.f32.xlu0 %v1963
          %v1996 = vpop.xlane.xlu0 %1995
          %1997 = vadd.xlane.f32.xlu0 %v1964
          %v1998 = vpop.xlane.xlu0 %1997
          %1999 = vadd.xlane.f32.xlu0 %v1965
          %v2000 = vpop.xlane.xlu0 %1999
          %2001 = vadd.xlane.f32.xlu0 %v1966
          %v2002 = vpop.xlane.xlu0 %2001
          %2003 = vadd.xlane.f32.xlu0 %v1967
          %v2004 = vpop.xlane.xlu0 %2003
          %2005 = vadd.xlane.f32.xlu0 %v1968
          %v2006 = vpop.xlane.xlu0 %2005
          %2007 = vadd.xlane.f32.xlu0 %v1969
          %v2008 = vpop.xlane.xlu0 %2007
          %2009 = vadd.xlane.f32.xlu0 %v1970
          %v2010 = vpop.xlane.xlu0 %2009
          %2011 = vadd.xlane.f32.xlu0 %v1971
          %v2012 = vpop.xlane.xlu0 %2011
          %2013 = vadd.xlane.f32.xlu0 %v1972
          %v2014 = vpop.xlane.xlu0 %2013
          %2015 = vadd.xlane.f32.xlu0 %v1973
          %v2016 = vpop.xlane.xlu0 %2015
          %2017 = vadd.xlane.f32.xlu0 %v1974
          %v2018 = vpop.xlane.xlu0 %2017
          %2019 = vadd.xlane.f32.xlu0 %v1975
          %v2020 = vpop.xlane.xlu0 %2019
          %2021 = vadd.xlane.f32.xlu0 %v1976
          %v2022 = vpop.xlane.xlu0 %2021
          %2023 = vadd.xlane.f32.xlu0 %v1977
          %v2024 = vpop.xlane.xlu0 %2023
          %2025 = vadd.xlane.f32.xlu0 %v1978
          %v2026 = vpop.xlane.xlu0 %2025
          %2027 = vadd.xlane.f32.xlu0 %v1979
          %v2028 = vpop.xlane.xlu0 %2027
          %2029 = vadd.xlane.f32.xlu0 %v1980
          %v2030 = vpop.xlane.xlu0 %2029
          %2031 = vadd.xlane.f32.xlu0 %v1981
          %v2032 = vpop.xlane.xlu0 %2031
          %2033 = vadd.xlane.f32.xlu0 %v1982
          %v2034 = vpop.xlane.xlu0 %2033
          %2035 = vadd.xlane.f32.xlu0 %v1983
          %v2036 = vpop.xlane.xlu0 %2035
          %2037 = vadd.xlane.f32.xlu0 %v1984
          %v2038 = vpop.xlane.xlu0 %2037
          %2039 = vadd.xlane.f32.xlu0 %v1985
          %v2040 = vpop.xlane.xlu0 %2039
          %2041 = vadd.xlane.f32.xlu0 %v1986
          %v2042 = vpop.xlane.xlu0 %2041
          %2043 = vadd.xlane.f32.xlu0 %v1987
          %v2044 = vpop.xlane.xlu0 %2043
          %2045 = vadd.xlane.f32.xlu0 %v1988
          %v2046 = vpop.xlane.xlu0 %2045
          %2047 = vadd.xlane.f32.xlu0 %v1989
          %v2048 = vpop.xlane.xlu0 %2047
          %2049 = vadd.xlane.f32.xlu0 %v1990
          %v2050 = vpop.xlane.xlu0 %2049
          %2051 = vadd.xlane.f32.xlu0 %v1991
          %v2052 = vpop.xlane.xlu0 %2051
          %2053 = vadd.xlane.f32.xlu0 %v1992
          %v2054 = vpop.xlane.xlu0 %2053
          %2055 = vadd.xlane.f32.xlu0 %v1993
          %v2056 = vpop.xlane.xlu0 %2055
          %2057 = vadd.xlane.f32.xlu0 %v1994
          %v2058 = vpop.xlane.xlu0 %2057
          %v2059 = vmax.f32 %v1996, 1e-24
          %v2060 = vmax.f32 %v1998, 1e-24
          %v2061 = vmax.f32 %v2000, 1e-24
          %v2062 = vmax.f32 %v2002, 1e-24
          %v2063 = vmax.f32 %v2004, 1e-24
          %v2064 = vmax.f32 %v2006, 1e-24
          %v2065 = vmax.f32 %v2008, 1e-24
          %v2066 = vmax.f32 %v2010, 1e-24
          %v2067 = vmax.f32 %v2012, 1e-24
          %v2068 = vmax.f32 %v2014, 1e-24
          %v2069 = vmax.f32 %v2016, 1e-24
          %v2070 = vmax.f32 %v2018, 1e-24
          %v2071 = vmax.f32 %v2020, 1e-24
          %v2072 = vmax.f32 %v2022, 1e-24
          %v2073 = vmax.f32 %v2024, 1e-24
          %v2074 = vmax.f32 %v2026, 1e-24
          %v2075 = vmax.f32 %v2028, 1e-24
          %v2076 = vmax.f32 %v2030, 1e-24
          %v2077 = vmax.f32 %v2032, 1e-24
          %v2078 = vmax.f32 %v2034, 1e-24
          %v2079 = vmax.f32 %v2036, 1e-24
          %v2080 = vmax.f32 %v2038, 1e-24
          %v2081 = vmax.f32 %v2040, 1e-24
          %v2082 = vmax.f32 %v2042, 1e-24
          %v2083 = vmax.f32 %v2044, 1e-24
          %v2084 = vmax.f32 %v2046, 1e-24
          %v2085 = vmax.f32 %v2048, 1e-24
          %v2086 = vmax.f32 %v2050, 1e-24
          %v2087 = vmax.f32 %v2052, 1e-24
          %v2088 = vmax.f32 %v2054, 1e-24
          %v2089 = vmax.f32 %v2056, 1e-24
          %v2090 = vmax.f32 %v2058, 1e-24
          %v2091 = vrsqrt.pop %v2059
          %v2092 = vrsqrt.pop %v2060
          %v2093 = vrsqrt.pop %v2061
          %v2094 = vrsqrt.pop %v2062
          %v2095 = vrsqrt.pop %v2063
          %v2096 = vrsqrt.pop %v2064
          %v2097 = vrsqrt.pop %v2065
          %v2098 = vrsqrt.pop %v2066
          %v2099 = vrsqrt.pop %v2067
          %v2100 = vrsqrt.pop %v2068
          %v2101 = vrsqrt.pop %v2069
          %v2102 = vrsqrt.pop %v2070
          %v2103 = vrsqrt.pop %v2071
          %v2104 = vrsqrt.pop %v2072
          %v2105 = vrsqrt.pop %v2073
          %v2106 = vrsqrt.pop %v2074
          %v2107 = vrsqrt.pop %v2075
          %v2108 = vrsqrt.pop %v2076
          %v2109 = vrsqrt.pop %v2077
          %v2110 = vrsqrt.pop %v2078
          %v2111 = vrsqrt.pop %v2079
          %v2112 = vrsqrt.pop %v2080
          %v2113 = vrsqrt.pop %v2081
          %v2114 = vrsqrt.pop %v2082
          %v2115 = vrsqrt.pop %v2083
          %v2116 = vrsqrt.pop %v2084
          %v2117 = vrsqrt.pop %v2085
          %v2118 = vrsqrt.pop %v2086
          %v2119 = vrsqrt.pop %v2087
          %v2120 = vrsqrt.pop %v2088
          %v2121 = vrsqrt.pop %v2089
          %v2122 = vrsqrt.pop %v2090
          %v2123 = vmul.f32 %v1931, %v2091
          %v2124 = vmul.f32 %v1932, %v2092
          %v2125 = vmul.f32 %v1933, %v2093
          %v2126 = vmul.f32 %v1934, %v2094
          %v2127 = vmul.f32 %v1935, %v2095
          %v2128 = vmul.f32 %v1936, %v2096
          %v2129 = vmul.f32 %v1937, %v2097
          %v2130 = vmul.f32 %v1938, %v2098
          %v2131 = vmul.f32 %v1939, %v2099
          %v2132 = vmul.f32 %v1940, %v2100
          %v2133 = vmul.f32 %v1941, %v2101
          %v2134 = vmul.f32 %v1942, %v2102
          %v2135 = vmul.f32 %v1943, %v2103
          %v2136 = vmul.f32 %v1944, %v2104
          %v2137 = vmul.f32 %v1945, %v2105
          %v2138 = vmul.f32 %v1946, %v2106
          %v2139 = vmul.f32 %v1947, %v2107
          %v2140 = vmul.f32 %v1948, %v2108
          %v2141 = vmul.f32 %v1949, %v2109
          %v2142 = vmul.f32 %v1950, %v2110
          %v2143 = vmul.f32 %v1951, %v2111
          %v2144 = vmul.f32 %v1952, %v2112
          %v2145 = vmul.f32 %v1953, %v2113
          %v2146 = vmul.f32 %v1954, %v2114
          %v2147 = vmul.f32 %v1955, %v2115
          %v2148 = vmul.f32 %v1956, %v2116
          %v2149 = vmul.f32 %v1957, %v2117
          %v2150 = vmul.f32 %v1958, %v2118
          %v2151 = vmul.f32 %v1959, %v2119
          %v2152 = vmul.f32 %v1960, %v2120
          %v2153 = vmul.f32 %v1961, %v2121
          %v2154 = vmul.f32 %v1962, %v2122
          %2155 = vst [vmem:[%s330] sm:$0xff] %v2123
          %2156 = vst [vmem:[%s330 + $0x8] sm:$0xff] %v2124
          %2157 = vst [vmem:[%s330 + $0x10] sm:$0xff] %v2125
          %2158 = vst [vmem:[%s330 + $0x18] sm:$0xff] %v2126
          %2159 = vst [vmem:[%s330 + $0x20] sm:$0xff] %v2127
          %2160 = vst [vmem:[%s330 + $0x28] sm:$0xff] %v2128
          %2161 = vst [vmem:[%s330 + $0x30] sm:$0xff] %v2129
          %2162 = vst [vmem:[%s330 + $0x38] sm:$0xff] %v2130
          %2163 = vst [vmem:[%s330 + $0x40] sm:$0xff] %v2131
          %2164 = vst [vmem:[%s330 + $0x48] sm:$0xff] %v2132
          %2165 = vst [vmem:[%s330 + $0x50] sm:$0xff] %v2133
          %2166 = vst [vmem:[%s330 + $0x58] sm:$0xff] %v2134
          %2167 = vst [vmem:[%s330 + $0x60] sm:$0xff] %v2135
          %2168 = vst [vmem:[%s330 + $0x68] sm:$0xff] %v2136
          %2169 = vst [vmem:[%s330 + $0x70] sm:$0xff] %v2137
          %2170 = vst [vmem:[%s330 + $0x78] sm:$0xff] %v2138
          %2171 = vst [vmem:[%s330 + $0x80] sm:$0xff] %v2139
          %2172 = vst [vmem:[%s330 + $0x88] sm:$0xff] %v2140
          %2173 = vst [vmem:[%s330 + $0x90] sm:$0xff] %v2141
          %2174 = vst [vmem:[%s330 + $0x98] sm:$0xff] %v2142
          %2175 = vst [vmem:[%s330 + $0xa0] sm:$0xff] %v2143
          %2176 = vst [vmem:[%s330 + $0xa8] sm:$0xff] %v2144
          %2177 = vst [vmem:[%s330 + $0xb0] sm:$0xff] %v2145
          %2178 = vst [vmem:[%s330 + $0xb8] sm:$0xff] %v2146
          %2179 = vst [vmem:[%s330 + $0xc0] sm:$0xff] %v2147
          %2180 = vst [vmem:[%s330 + $0xc8] sm:$0xff] %v2148
          %2181 = vst [vmem:[%s330 + $0xd0] sm:$0xff] %v2149
          %2182 = vst [vmem:[%s330 + $0xd8] sm:$0xff] %v2150
          %2183 = vst [vmem:[%s330 + $0xe0] sm:$0xff] %v2151
          %2184 = vst [vmem:[%s330 + $0xe8] sm:$0xff] %v2152
          %2185 = vst [vmem:[%s330 + $0xf0] sm:$0xff] %v2153
          %2186 = vst [vmem:[%s330 + $0xf8] sm:$0xff] %v2154
        $region68: #{aggregator_forward.1} parent=43 // pred_fallthru
          _
        %s2187 = sand.u32 %s178, 1
        %s2188 = scalar_lea.sflag [#allocation5], %s2187
        %s2189 = sand.u32 %s178, 1
        %s2190 = smul.addr %s2189, 256
        %s2191 = scalar_lea.vmem [#allocation11], %s2190
        // Predicated region
        $region69: #{aggregator_forward.1} parent=43 // pred_check
          %p2192 = pneg %p188
        $region70: #{aggregator_forward.1} parent=43 // pred_check_branch
          %2194 = sbr.rel (%p2192) target = $region72
        $region71: #{aggregator_forward.1} parent=43 // pred_region
          %s2195 = smul.u32 32, %s29
          %s2197 = ssub.s32 4096, 4096
          %2198 = vsyncadd %s2188, %s2197
          %s2199 = smul.addr %s2195, 128
          %s2200 = scalar_lea.hbm %s6, %s2199
          %s2201 = sshll.u32 %s2191, 4
          %s2202 = int_to_ptr.vmem [resolvable:$true] %s2201
          %2207 = dma.vmem_to_hbm [thread:$0]  %s2202, 4096, %s2200, %s2188, 128, 128, 8
        $region72: #{aggregator_forward.1} parent=43 // pred_fallthru
          _
      $region44: #{aggregator_forward.1} parent=5 // pred_fallthru
        _
      %p2208 = scmp.le.s32.totalorder 2, %s20
      // Predicated region
      $region73: #{aggregator_forward.1} parent=5 // pred_check
        %p2209 = pneg %p2208
      $region74: #{aggregator_forward.1} parent=5 // pred_check_branch
        %2211 = sbr.rel (%p2209) target = $region76
      $region75: #{aggregator_forward.1} parent=5 // pred_region
        %s2212 = ssub.s32 %s20, 2
        // Predicated region
        $region77: #{aggregator_forward.1} parent=75 // pred_check
          %p2213 = pneg %p194
        $region78: #{aggregator_forward.1} parent=75 // pred_check_branch
          %2215 = sbr.rel (%p2213) target = $region80
        $region79: #{aggregator_forward.1} parent=75 // pred_region
          %s2216 = sand.u32 %s179, 1
          %s2217 = scalar_lea.sflag [#allocation5], %s2216
          %s2218 = sand.u32 %s179, 1
          %s2219 = smul.addr %s2218, 256
          %s2220 = scalar_lea.vmem [#allocation11], %s2219
          %2221 = dma.done %s2217, 4096
        $region80: #{aggregator_forward.1} parent=75 // pred_fallthru
          _
      $region76: #{aggregator_forward.1} parent=5 // pred_fallthru
        _
    $region6: #{aggregator_forward.1} parent=1 // loop_footer
      %s24 = sadd.s32 1, %s20
    $region7: #{aggregator_forward.1} parent=1 // loop_footer_branch
      %19 = sbr.rel target = $region3
    $region8: #{aggregator_forward.1} parent=1 // loop_exit
      _
    %2222 = vsyncpa [#allocation4], 1
    %s2223 = scalar_lea.sflag [#allocation4], 1
    %2224 = vsyncpa %s2223, 1
    %2225 = vsyncpa [#allocation7], 1
    %2226 = vsyncpa [#allocation10], 1
    %2227 = vsyncpa [#allocation5], 1
    %s2228 = scalar_lea.sflag [#allocation5], 1
    %2229 = vsyncpa %s2228, 1

</llo_original>
